<compile_context>
chip_gen: v5e
topology: v5e:2x2
jax: 0.10.0
libtpu: 0.0.40
codegen_flags: <defaults>
</compile_context>

<pallas_src>
import functools
import math

import jax
import jax.numpy as jnp
from jax.experimental import pallas as pl
from jax.experimental.pallas import tpu as pltpu

LN_EPS = 1e-5          # torch.nn.LayerNorm default eps
NEG_BIG = -1e30        # large finite negative for causal masking (NaN-safe)


def _vmem_limit_bytes():
    try:
        cap = getattr(pltpu.get_tpu_info(), "vmem_capacity_bytes", None)
        if cap:
            return int(cap) * 7 // 8          # leave headroom (v7x: ~56 MiB)
    except Exception:
        pass
    return 64 << 20


_VMEM_LIMIT = _vmem_limit_bytes()


def _pick_kv_tile(c):
    if c <= 512:
        return c
    for t in (512, 256, 128):
        if c % t == 0:
            return t
    return c


def _pick_vocab_tile(v):
    if v <= 2048:
        return v
    for t in (2048, 1024, 512, 256, 128):
        if v % t == 0:
            return t
    return v


def _pick_row_tile(r):
    if r <= 512:
        return r
    for t in (512, 256, 128):
        if r % t == 0:
            return t
    return r


# ---------------------------------------------------------------------------
# Kernels
# ---------------------------------------------------------------------------
def fused_blocks_kernel(x_ref, mask_ref, ln1w_ref, ln1b_ref, wqkv_ref, wo_ref,
                        ln2w_ref, ln2b_ref, w1_ref, b1_ref, w2_ref, b2_ref,
                        o_ref, h_ref, *, batch_tile, seq_len, num_heads,
                        head_size, kv_tile):
    """grid = (batch_tile_idx, layer_idx); activations carried in VMEM scratch."""
    layer = pl.program_id(1)
    last_layer = pl.num_programs(1) - 1

    B, C, H, hs = batch_tile, seq_len, num_heads, head_size
    HD = H * hs
    R = B * C
    Z = B * H
    hs3 = 3 * hs

    @pl.when(layer == 0)
    def _():
        h_ref[...] = x_ref[...].reshape(R, -1).astype(jnp.float32)

    x = h_ref[...]                                           # (R, E) f32

    def layer_norm(v, w, b):
        mu = jnp.mean(v, axis=-1, keepdims=True)
        var = jnp.mean(jnp.square(v - mu), axis=-1, keepdims=True)
        return (v - mu) * jax.lax.rsqrt(var + LN_EPS) * w + b

    # ---- LayerNorm 1 (f32 VPU math) ----
    xn = layer_norm(x, ln1w_ref[...], ln1b_ref[...])

    # ---- fused QKV projection (attention_bias=False); bf16 weights, f32 acc ----
    qkv = jnp.dot(xn.astype(jnp.bfloat16), wqkv_ref[...],
                  preferred_element_type=jnp.float32)        # (R, 3*HD) f32

    # head-major relayout: ONE contiguous slab copy per head (weight columns
    # were packed [h, (q|k|v), d] at init), instead of 3H slices + 3 concats.
    slab = jnp.concatenate(
        [qkv[:, h * hs3:(h + 1) * hs3].reshape(B, 1, C, hs3) for h in range(H)],
        axis=1).reshape(Z, C, hs3)                           # (B*H, C, 3*hs) f32

    scale = 1.0 / math.sqrt(hs)
    qh = (slab[:, :, 0 * hs:1 * hs] * scale).astype(jnp.bfloat16)  # scale folded into Q
    kh = slab[:, :, 1 * hs:2 * hs].astype(jnp.bfloat16)
    vh = slab[:, :, 2 * hs:3 * hs].astype(jnp.bfloat16)

    # ---- flash-style causal attention: online softmax over KV tiles --------
    # Live score memory is bounded to (B*H, C, kv_tile); the additive causal
    # mask is a resident VMEM input (built once outside the kernel).
    # TODO(synk): for very long C, stream K/V tiles from HBM with
    #             pltpu.emit_pipeline instead of slicing resident VMEM values.
    n_kv = C // kv_tile
    m_i = jnp.full((Z, C, 1), -jnp.inf, jnp.float32)
    l_i = jnp.zeros((Z, C, 1), jnp.float32)
    acc = jnp.zeros((Z, C, hs), jnp.float32)
    for t in range(n_kv):
        lo, hi = t * kv_tile, (t + 1) * kv_tile
        k_t = kh[:, lo:hi, :]
        v_t = vh[:, lo:hi, :]
        s = jnp.einsum('zqd,zkd->zqk', qh, k_t,
                       preferred_element_type=jnp.float32)   # (Z, C, tk) f32
        s = s + mask_ref[:, lo:hi][None, :, :]               # additive causal bias
        m_new = jnp.maximum(m_i, jnp.max(s, axis=-1, keepdims=True))
        alpha = jnp.exp(m_i - m_new)
        p = jnp.exp(s - m_new)
        l_i = alpha * l_i + jnp.sum(p, axis=-1, keepdims=True)
        acc = alpha * acc + jnp.einsum('zqk,zkd->zqd', p.astype(jnp.bfloat16),
                                       v_t, preferred_element_type=jnp.float32)
        m_i = m_new

    att = acc * (1.0 / l_i)                                  # exact normalize (small divide)

    # back to (R, HD) in torch's concat-heads column order, then ONE out-proj
    att = att.reshape(B, H, C, hs)
    att_flat = jnp.concatenate(
        [att[:, h].reshape(R, hs) for h in range(H)], axis=-1)      # (R, HD)

    y = jnp.dot(att_flat.astype(jnp.bfloat16), wo_ref[...],
                preferred_element_type=jnp.float32) + x      # residual (drop_1 = id)

    # ---- LayerNorm 2 + FeedForward (Linear -> ReLU -> Linear) + residual ----
    yn = layer_norm(y, ln2w_ref[...], ln2b_ref[...])
    h1 = jnp.dot(yn.astype(jnp.bfloat16), w1_ref[...],
                 preferred_element_type=jnp.float32) + b1_ref[...]
    h1 = jnp.maximum(h1, 0.0)
    ff = jnp.dot(h1.astype(jnp.bfloat16), w2_ref[...],
                 preferred_element_type=jnp.float32) + b2_ref[...]
    out = ff + y

    @pl.when(layer < last_layer)
    def _():
        h_ref[...] = out                                     # carry to next layer

    @pl.when(layer == last_layer)
    def _():
        o_ref[...] = out.reshape(B, C, -1).astype(o_ref.dtype)


def final_logits_kernel(h_ref, w_ref, b_ref, o_ref):
    """Tied-weight logits: bf16 h tile x (TILE_V, E) contracted on E (no transpose)."""
    logits = jax.lax.dot_general(
        h_ref[...], w_ref[...].astype(jnp.bfloat16),
        dimension_numbers=(((1,), (1,)), ((), ())),
        preferred_element_type=jnp.float32)
    o_ref[...] = (logits + b_ref[...]).astype(o_ref.dtype)


# ---------------------------------------------------------------------------
# Wrappers (pallas_call plumbing)
# ---------------------------------------------------------------------------
def _stacked_spec(arr):
    """BlockSpec that squeezes the leading layer axis and takes the full rest."""
    nd = arr.ndim
    return pl.BlockSpec((None,) + arr.shape[1:],
                        lambda b, l, _n=nd: (l,) + (0,) * (_n - 1))


def run_blocks(x, mask_bias, blocks, *, num_heads, head_size, num_blocks):
    B, C, E = x.shape
    # Up to 2 batch tiles: feeds both v7x TensorCores via the "parallel" axis
    # while at most doubling per-layer weight re-streaming.
    num_bt = 2 if (B >= 2 and B % 2 == 0) else 1
    bt = B // num_bt
    kv_tile = _pick_kv_tile(C)

    kernel = functools.partial(fused_blocks_kernel, batch_tile=bt, seq_len=C,
                               num_heads=num_heads, head_size=head_size,
                               kv_tile=kv_tile)
    order = ("ln1w", "ln1b", "wqkv", "wo", "ln2w", "ln2b", "w1", "b1", "w2", "b2")
    return pl.pallas_call(
        kernel,
        out_shape=jax.ShapeDtypeStruct((B, C, E), jnp.bfloat16),     # bf16 hand-off
        grid=(num_bt, num_blocks),
        in_specs=[pl.BlockSpec((bt, C, E), lambda b, l: (b, 0, 0)),  # activation
                  pl.BlockSpec((C, C), lambda b, l: (0, 0))]         # causal bias (resident)
                 + [_stacked_spec(blocks[name]) for name in order],
        out_specs=pl.BlockSpec((bt, C, E), lambda b, l: (b, 0, 0)),  # written at last layer
        scratch_shapes=[pltpu.VMEM((bt * C, E), jnp.float32)],       # layer-to-layer carry
        compiler_params=pltpu.CompilerParams(
            dimension_semantics=("parallel", "arbitrary"),
            vmem_limit_bytes=_VMEM_LIMIT),
    )(x, mask_bias, *(blocks[name] for name in order))


def run_final_logits(h_flat, tok_emb, bias):
    R, E = h_flat.shape
    V = tok_emb.shape[0]
    tile_v = _pick_vocab_tile(V)
    tile_r = _pick_row_tile(R)
    return pl.pallas_call(
        final_logits_kernel,
        out_shape=jax.ShapeDtypeStruct((R, V), jnp.float32),
        grid=(R // tile_r, V // tile_v),
        in_specs=[pl.BlockSpec((tile_r, E), lambda i, j: (i, 0)),    # bf16 h rows
                  pl.BlockSpec((tile_v, E), lambda i, j: (j, 0)),    # vocab-tiled weight
                  pl.BlockSpec((1, tile_v), lambda i, j: (0, j))],
        out_specs=pl.BlockSpec((tile_r, tile_v), lambda i, j: (i, j)),
        compiler_params=pltpu.CompilerParams(
            dimension_semantics=("parallel", "parallel"),
            vmem_limit_bytes=_VMEM_LIMIT),
    )(h_flat, tok_emb, bias)


# ---------------------------------------------------------------------------
# Parameter init (deterministic, mirrors MiniGPT._init_weights)
# ---------------------------------------------------------------------------
def init_params(key, cfg):
    E = cfg["embedding_size"]
    H = cfg["num_heads"]
    hs = cfg["head_size"]
    HD = H * hs
    V = cfg["vocab_size"]
    L = cfg["max_context_length"]
    nb = cfg["num_blocks"]
    scaled_std = 0.02 * (2 * nb) ** (-0.5)          # SCALE_BY_NUM_BLOCKS layers

    keys = jax.random.split(key, 2 + 4 * nb)
    tok_emb = 0.02 * jax.random.normal(keys[0], (V, E), jnp.float32)   # tied with logits
    pos_emb = 0.02 * jax.random.normal(keys[1], (L, E), jnp.float32)

    wqkv, wo, w1, w2 = [], [], [], []
    ki = 2
    for _ in range(nb):
        w = 0.02 * jax.random.normal(keys[ki], (E, 3 * HD), jnp.float32); ki += 1
        wq, wk, wv = w[:, :HD], w[:, HD:2 * HD], w[:, 2 * HD:]
        # per-head packed column order [h, (q|k|v), d]: a torch attn_c.weight
        # checkpoint would be permuted the same way at load time.
        packed = jnp.concatenate(
            [jnp.concatenate([wq[:, h * hs:(h + 1) * hs],
                              wk[:, h * hs:(h + 1) * hs],
                              wv[:, h * hs:(h + 1) * hs]], axis=1)
             for h in range(H)], axis=1)
        wqkv.append(packed)
        wo.append(scaled_std * jax.random.normal(keys[ki], (HD, E), jnp.float32)); ki += 1
        w1.append(0.02 * jax.random.normal(keys[ki], (E, 4 * E), jnp.float32)); ki += 1
        w2.append(scaled_std * jax.random.normal(keys[ki], (4 * E, E), jnp.float32)); ki += 1

    blocks = dict(
        ln1w=jnp.ones((nb, 1, E), jnp.float32), ln1b=jnp.zeros((nb, 1, E), jnp.float32),
        wqkv=jnp.stack(wqkv).astype(jnp.bfloat16),           # bf16 weight storage
        wo=jnp.stack(wo).astype(jnp.bfloat16),
        ln2w=jnp.ones((nb, 1, E), jnp.float32), ln2b=jnp.zeros((nb, 1, E), jnp.float32),
        w1=jnp.stack(w1).astype(jnp.bfloat16), b1=jnp.zeros((nb, 1, 4 * E), jnp.float32),
        w2=jnp.stack(w2).astype(jnp.bfloat16), b2=jnp.zeros((nb, 1, E), jnp.float32),
    )
    final_b = jnp.zeros((1, V), jnp.float32)        # final_layer_bias=True, init zero
    return dict(tok_emb=tok_emb, pos_emb=pos_emb, blocks=blocks, final_b=final_b)


# ---------------------------------------------------------------------------
# Full forward
# ---------------------------------------------------------------------------
def minigpt_forward(tokens, params, cfg):
    B, C = tokens.shape
    E = cfg["embedding_size"]
    V = cfg["vocab_size"]

    # glue: embedding gather + positional add (nn.Dropout = identity in eval)
    emb = jnp.take(params["tok_emb"], tokens, axis=0)            # (B, C, E)
    pos = params["pos_emb"][:C]                                  # (C, E)
    h = (emb + pos[None, :, :]).astype(jnp.float32)              # (B, C, E)

    # causal additive mask bias, built ONCE (not per layer inside the kernel)
    idx = jnp.arange(C, dtype=jnp.int32)
    mask_bias = jnp.where(idx[None, :] > idx[:, None], NEG_BIG, 0.0).astype(jnp.float32)

    # all transformer blocks in one pallas_call (batch tiles x layers grid)
    h = run_blocks(h, mask_bias, params["blocks"],
                   num_heads=cfg["num_heads"], head_size=cfg["head_size"],
                   num_blocks=cfg["num_blocks"])                 # (B, C, E) bf16

    # final_layer_norm=False -> Identity; tied-weight logits projection
    logits = run_final_logits(h.reshape(B * C, E), params["tok_emb"], params["final_b"])
    return logits.reshape(B, C, V)


if __name__ == "__main__":
    cfg = dict(
        vocab_size=64,
        max_context_length=16,
        embedding_size=32,
        head_size=8,
        num_heads=4,
        num_blocks=2,
    )
    key = jax.random.PRNGKey(0)
    params = init_params(key, cfg)

    B, C = 2, 8
    tokens = jax.random.randint(jax.random.fold_in(key, 12345),
                                (B, C), 0, cfg["vocab_size"], dtype=jnp.int32)

    logits = minigpt_forward(tokens, params, cfg)
    jax.block_until_ready(logits)
    assert logits.shape == (B, C, cfg["vocab_size"]), logits.shape
    assert logits.dtype == jnp.float32
    assert bool(jnp.all(jnp.isfinite(logits)))
    print("KERNEL_OK")
</pallas_src>

<mosaic_0001>
module attributes {stable_mosaic.version = 11 : i64} {
  func.func @fused_blocks_kernel(%arg0: i32, %arg1: i32, %arg2: memref<1x8x32xf32, #tpu.memory_space<vmem>>, %arg3: memref<8x8xf32, #tpu.memory_space<vmem>>, %arg4: memref<1x1x32xf32, #tpu.memory_space<vmem>>, %arg5: memref<1x1x32xf32, #tpu.memory_space<vmem>>, %arg6: memref<1x32x96xbf16, #tpu.memory_space<vmem>>, %arg7: memref<1x32x32xbf16, #tpu.memory_space<vmem>>, %arg8: memref<1x1x32xf32, #tpu.memory_space<vmem>>, %arg9: memref<1x1x32xf32, #tpu.memory_space<vmem>>, %arg10: memref<1x32x128xbf16, #tpu.memory_space<vmem>>, %arg11: memref<1x1x128xf32, #tpu.memory_space<vmem>>, %arg12: memref<1x128x32xbf16, #tpu.memory_space<vmem>>, %arg13: memref<1x1x32xf32, #tpu.memory_space<vmem>>, %arg14: memref<1x8x32xbf16, #tpu.memory_space<vmem>>, %arg15: memref<8x32xf32, #tpu.memory_space<vmem>>) attributes {dimension_semantics = [#tpu.dimension_semantics<parallel>, #tpu.dimension_semantics<arbitrary>], iteration_bounds = array<i64: 2, 2>, scalar_prefetch = 0 : i64, scratch_operands = 1 : i64, tpu.core_type = #tpu.core_type<tc>, window_params = [{transform_indices = @transform_0, window_bounds = array<i64: 1, 8, 32>}, {pipeline_mode = #tpu.pipeline_mode<synchronous>, transform_indices = @transform_1, window_bounds = array<i64: 8, 8>}, {transform_indices = @transform_2, window_bounds = array<i64: 1, 1, 32>}, {transform_indices = @transform_3, window_bounds = array<i64: 1, 1, 32>}, {transform_indices = @transform_4, window_bounds = array<i64: 1, 32, 96>}, {transform_indices = @transform_5, window_bounds = array<i64: 1, 32, 32>}, {transform_indices = @transform_6, window_bounds = array<i64: 1, 1, 32>}, {transform_indices = @transform_7, window_bounds = array<i64: 1, 1, 32>}, {transform_indices = @transform_8, window_bounds = array<i64: 1, 32, 128>}, {transform_indices = @transform_9, window_bounds = array<i64: 1, 1, 128>}, {transform_indices = @transform_10, window_bounds = array<i64: 1, 128, 32>}, {transform_indices = @transform_11, window_bounds = array<i64: 1, 1, 32>}, {transform_indices = @transform_12, window_bounds = array<i64: 1, 8, 32>}]} {
    %c0_i32 = arith.constant 0 : i32
    %0 = arith.cmpi eq, %arg1, %c0_i32 : i32
    %1 = arith.extui %0 : i1 to i32
    %c0_i32_0 = arith.constant 0 : i32
    %2 = arith.cmpi ne, %1, %c0_i32_0 : i32
    scf.if %2 {
      %c0_60 = arith.constant 0 : index
      %c0_61 = arith.constant 0 : index
      %c0_62 = arith.constant 0 : index
      %151 = vector.load %arg2[%c0_60, %c0_61, %c0_62] : memref<1x8x32xf32, #tpu.memory_space<vmem>>, vector<1x8x32xf32>
      %152 = vector.shape_cast %151 : vector<1x8x32xf32> to vector<8x32xf32>
      %c0_63 = arith.constant 0 : index
      %c0_64 = arith.constant 0 : index
      %153 = vector.load %arg15[%c0_63, %c0_64] : memref<8x32xf32, #tpu.memory_space<vmem>>, vector<8x32xf32>
      tpu.vector_store %arg15[%c0_63, %c0_64], %152 {strides = array<i32>} : memref<8x32xf32, #tpu.memory_space<vmem>>, vector<8x32xf32>,
    } else {
    }
    %c0 = arith.constant 0 : index
    %c0_1 = arith.constant 0 : index
    %3 = vector.load %arg15[%c0, %c0_1] : memref<8x32xf32, #tpu.memory_space<vmem>>, vector<8x32xf32>
    %c0_2 = arith.constant 0 : index
    %c0_3 = arith.constant 0 : index
    %c0_4 = arith.constant 0 : index
    %4 = vector.load %arg4[%c0_2, %c0_3, %c0_4] : memref<1x1x32xf32, #tpu.memory_space<vmem>>, vector<1x1x32xf32>
    %5 = vector.shape_cast %4 : vector<1x1x32xf32> to vector<1x32xf32>
    %c0_5 = arith.constant 0 : index
    %c0_6 = arith.constant 0 : index
    %c0_7 = arith.constant 0 : index
    %6 = vector.load %arg5[%c0_5, %c0_6, %c0_7] : memref<1x1x32xf32, #tpu.memory_space<vmem>>, vector<1x1x32xf32>
    %7 = vector.shape_cast %6 : vector<1x1x32xf32> to vector<1x32xf32>
    %cst = arith.constant dense<0.000000e+00> : vector<8xf32>
    %8 = vector.multi_reduction <add>, %3, %cst [1] : vector<8x32xf32> to vector<8xf32>
    %9 = vector.shape_cast %8 : vector<8xf32> to vector<8x1xf32>
    %cst_8 = arith.constant 3.200000e+01 : f32
    %10 = vector.broadcast %cst_8 : f32 to vector<8x1xf32>
    %11 = arith.divf %9, %10 : vector<8x1xf32>
    %12 = vector.broadcast %11 : vector<8x1xf32> to vector<8x32xf32>
    %13 = arith.subf %3, %12 : vector<8x32xf32>
    %14 = arith.mulf %13, %13 : vector<8x32xf32>
    %cst_9 = arith.constant dense<0.000000e+00> : vector<8xf32>
    %15 = vector.multi_reduction <add>, %14, %cst_9 [1] : vector<8x32xf32> to vector<8xf32>
    %16 = vector.shape_cast %15 : vector<8xf32> to vector<8x1xf32>
    %cst_10 = arith.constant 3.200000e+01 : f32
    %17 = vector.broadcast %cst_10 : f32 to vector<8x1xf32>
    %18 = arith.divf %16, %17 : vector<8x1xf32>
    %19 = vector.broadcast %11 : vector<8x1xf32> to vector<8x32xf32>
    %20 = arith.subf %3, %19 : vector<8x32xf32>
    %cst_11 = arith.constant 9.99999974E-6 : f32
    %21 = vector.broadcast %cst_11 : f32 to vector<8x1xf32>
    %22 = arith.addf %18, %21 : vector<8x1xf32>
    %23 = math.rsqrt %22 : vector<8x1xf32>
    %24 = vector.broadcast %23 : vector<8x1xf32> to vector<8x32xf32>
    %25 = arith.mulf %20, %24 : vector<8x32xf32>
    %26 = vector.broadcast %5 : vector<1x32xf32> to vector<8x32xf32>
    %27 = arith.mulf %25, %26 : vector<8x32xf32>
    %28 = vector.broadcast %7 : vector<1x32xf32> to vector<8x32xf32>
    %29 = arith.addf %27, %28 : vector<8x32xf32>
    %30 = arith.truncf %29 : vector<8x32xf32> to vector<8x32xbf16>
    %c0_12 = arith.constant 0 : index
    %c0_13 = arith.constant 0 : index
    %c0_14 = arith.constant 0 : index
    %31 = vector.load %arg6[%c0_12, %c0_13, %c0_14] : memref<1x32x96xbf16, #tpu.memory_space<vmem>>, vector<1x32x96xbf16>
    %32 = vector.shape_cast %31 : vector<1x32x96xbf16> to vector<32x96xbf16>
    %cst_15 = arith.constant dense<0.000000e+00> : vector<8x96xf32>
    %33 = tpu.matmul %30, %32, %cst_15 {dimension_numbers = #tpu.dot_dimension_numbers<[1], [0], [0], [1], [0, 0, 1, 1], [], []>} : vector<8x32xbf16>, vector<32x96xbf16>, vector<8x96xf32> -> vector<8x96xf32>
    %34 = vector.extract_strided_slice %33 {offsets = [0, 0], sizes = [8, 24], strides = [1, 1]} : vector<8x96xf32> to vector<8x24xf32>
    %35 = vector.shape_cast %34 : vector<8x24xf32> to vector<1x1x8x24xf32>
    %36 = vector.extract_strided_slice %33 {offsets = [0, 24], sizes = [8, 24], strides = [1, 1]} : vector<8x96xf32> to vector<8x24xf32>
    %37 = vector.shape_cast %36 : vector<8x24xf32> to vector<1x1x8x24xf32>
    %38 = vector.extract_strided_slice %33 {offsets = [0, 48], sizes = [8, 24], strides = [1, 1]} : vector<8x96xf32> to vector<8x24xf32>
    %39 = vector.shape_cast %38 : vector<8x24xf32> to vector<1x1x8x24xf32>
    %40 = vector.extract_strided_slice %33 {offsets = [0, 72], sizes = [8, 24], strides = [1, 1]} : vector<8x96xf32> to vector<8x24xf32>
    %41 = vector.shape_cast %40 : vector<8x24xf32> to vector<1x1x8x24xf32>
    %42 = tpu.concatenate %35, %37, %39, %41 in 1 : vector<1x1x8x24xf32>, vector<1x1x8x24xf32>, vector<1x1x8x24xf32>, vector<1x1x8x24xf32> -> vector<1x4x8x24xf32>
    %43 = vector.shape_cast %42 : vector<1x4x8x24xf32> to vector<4x8x24xf32>
    %44 = vector.extract_strided_slice %43 {offsets = [0, 0, 0], sizes = [4, 8, 8], strides = [1, 1, 1]} : vector<4x8x24xf32> to vector<4x8x8xf32>
    %cst_16 = arith.constant 0.353553385 : f32
    %45 = vector.broadcast %cst_16 : f32 to vector<4x8x8xf32>
    %46 = arith.mulf %44, %45 : vector<4x8x8xf32>
    %47 = arith.truncf %46 : vector<4x8x8xf32> to vector<4x8x8xbf16>
    %48 = vector.extract_strided_slice %43 {offsets = [0, 0, 8], sizes = [4, 8, 8], strides = [1, 1, 1]} : vector<4x8x24xf32> to vector<4x8x8xf32>
    %49 = arith.truncf %48 : vector<4x8x8xf32> to vector<4x8x8xbf16>
    %50 = vector.extract_strided_slice %43 {offsets = [0, 0, 16], sizes = [4, 8, 8], strides = [1, 1, 1]} : vector<4x8x24xf32> to vector<4x8x8xf32>
    %51 = arith.truncf %50 : vector<4x8x8xf32> to vector<4x8x8xbf16>
    %cst_17 = arith.constant 0xFF800000 : f32
    %52 = vector.broadcast %cst_17 : f32 to vector<4x8x1xf32>
    %cst_18 = arith.constant 0.000000e+00 : f32
    %53 = vector.broadcast %cst_18 : f32 to vector<4x8x1xf32>
    %cst_19 = arith.constant 0.000000e+00 : f32
    %54 = vector.broadcast %cst_19 : f32 to vector<4x8x8xf32>
    "tpu.trace_start"() <{level = 10 : i32, message = "zqd,zkd->zqk"}> : () -> ()
    %cst_20 = arith.constant dense<0.000000e+00> : vector<4x8x8xf32>
    %55 = tpu.matmul %47, %49, %cst_20 {dimension_numbers = #tpu.dot_dimension_numbers<[2], [2], [1], [1], [0, 0, 0, 1, 1, 1], [0], [0]>} : vector<4x8x8xbf16>, vector<4x8x8xbf16>, vector<4x8x8xf32> -> vector<4x8x8xf32>
    "tpu.trace_stop"() : () -> ()
    %c0_21 = arith.constant 0 : index
    %c0_22 = arith.constant 0 : index
    %56 = vector.load %arg3[%c0_21, %c0_22] : memref<8x8xf32, #tpu.memory_space<vmem>>, vector<8x8xf32>
    %57 = vector.shape_cast %56 : vector<8x8xf32> to vector<1x8x8xf32>
    %58 = vector.broadcast %57 : vector<1x8x8xf32> to vector<4x8x8xf32>
    %59 = arith.addf %55, %58 : vector<4x8x8xf32>
    %cst_23 = arith.constant dense<0xFF800000> : vector<4x8xf32>
    %60 = vector.multi_reduction <maximumf>, %59, %cst_23 [2] : vector<4x8x8xf32> to vector<4x8xf32>
    %61 = vector.shape_cast %60 : vector<4x8xf32> to vector<4x8x1xf32>
    %62 = arith.maximumf %52, %61 : vector<4x8x1xf32>
    %63 = arith.subf %52, %62 : vector<4x8x1xf32>
    %64 = math.exp %63 : vector<4x8x1xf32>
    %65 = vector.broadcast %62 : vector<4x8x1xf32> to vector<4x8x8xf32>
    %66 = arith.subf %59, %65 : vector<4x8x8xf32>
    %67 = math.exp %66 : vector<4x8x8xf32>
    %68 = arith.mulf %64, %53 : vector<4x8x1xf32>
    %cst_24 = arith.constant dense<0.000000e+00> : vector<4x8xf32>
    %69 = vector.multi_reduction <add>, %67, %cst_24 [2] : vector<4x8x8xf32> to vector<4x8xf32>
    %70 = vector.shape_cast %69 : vector<4x8xf32> to vector<4x8x1xf32>
    %71 = arith.addf %68, %70 : vector<4x8x1xf32>
    %72 = vector.broadcast %64 : vector<4x8x1xf32> to vector<4x8x8xf32>
    %73 = arith.mulf %72, %54 : vector<4x8x8xf32>
    %74 = arith.truncf %67 : vector<4x8x8xf32> to vector<4x8x8xbf16>
    "tpu.trace_start"() <{level = 10 : i32, message = "zqk,zkd->zqd"}> : () -> ()
    %cst_25 = arith.constant dense<0.000000e+00> : vector<4x8x8xf32>
    %75 = tpu.matmul %74, %51, %cst_25 {dimension_numbers = #tpu.dot_dimension_numbers<[2], [1], [1], [2], [0, 0, 0, 1, 1, 2], [0], [0]>} : vector<4x8x8xbf16>, vector<4x8x8xbf16>, vector<4x8x8xf32> -> vector<4x8x8xf32>
    "tpu.trace_stop"() : () -> ()
    %76 = arith.addf %73, %75 : vector<4x8x8xf32>
    %cst_26 = arith.constant 1.000000e+00 : f32
    %77 = vector.broadcast %cst_26 : f32 to vector<4x8x1xf32>
    %78 = arith.divf %77, %71 : vector<4x8x1xf32>
    %79 = vector.broadcast %78 : vector<4x8x1xf32> to vector<4x8x8xf32>
    %80 = arith.mulf %76, %79 : vector<4x8x8xf32>
    %81 = vector.shape_cast %80 : vector<4x8x8xf32> to vector<1x4x8x8xf32>
    %82 = vector.extract_strided_slice %81 {offsets = [0, 0, 0, 0], sizes = [1, 1, 8, 8], strides = [1, 1, 1, 1]} : vector<1x4x8x8xf32> to vector<1x1x8x8xf32>
    %83 = vector.shape_cast %82 : vector<1x1x8x8xf32> to vector<1x8x8xf32>
    %84 = vector.shape_cast %83 : vector<1x8x8xf32> to vector<8x8xf32>
    %85 = vector.extract_strided_slice %81 {offsets = [0, 1, 0, 0], sizes = [1, 1, 8, 8], strides = [1, 1, 1, 1]} : vector<1x4x8x8xf32> to vector<1x1x8x8xf32>
    %86 = vector.shape_cast %85 : vector<1x1x8x8xf32> to vector<1x8x8xf32>
    %87 = vector.shape_cast %86 : vector<1x8x8xf32> to vector<8x8xf32>
    %88 = vector.extract_strided_slice %81 {offsets = [0, 2, 0, 0], sizes = [1, 1, 8, 8], strides = [1, 1, 1, 1]} : vector<1x4x8x8xf32> to vector<1x1x8x8xf32>
    %89 = vector.shape_cast %88 : vector<1x1x8x8xf32> to vector<1x8x8xf32>
    %90 = vector.shape_cast %89 : vector<1x8x8xf32> to vector<8x8xf32>
    %91 = vector.extract_strided_slice %81 {offsets = [0, 3, 0, 0], sizes = [1, 1, 8, 8], strides = [1, 1, 1, 1]} : vector<1x4x8x8xf32> to vector<1x1x8x8xf32>
    %92 = vector.shape_cast %91 : vector<1x1x8x8xf32> to vector<1x8x8xf32>
    %93 = vector.shape_cast %92 : vector<1x8x8xf32> to vector<8x8xf32>
    %94 = tpu.concatenate %84, %87, %90, %93 in 1 : vector<8x8xf32>, vector<8x8xf32>, vector<8x8xf32>, vector<8x8xf32> -> vector<8x32xf32>
    %95 = arith.truncf %94 : vector<8x32xf32> to vector<8x32xbf16>
    %c0_27 = arith.constant 0 : index
    %c0_28 = arith.constant 0 : index
    %c0_29 = arith.constant 0 : index
    %96 = vector.load %arg7[%c0_27, %c0_28, %c0_29] : memref<1x32x32xbf16, #tpu.memory_space<vmem>>, vector<1x32x32xbf16>
    %97 = vector.shape_cast %96 : vector<1x32x32xbf16> to vector<32x32xbf16>
    %cst_30 = arith.constant dense<0.000000e+00> : vector<8x32xf32>
    %98 = tpu.matmul %95, %97, %cst_30 {dimension_numbers = #tpu.dot_dimension_numbers<[1], [0], [0], [1], [0, 0, 1, 1], [], []>} : vector<8x32xbf16>, vector<32x32xbf16>, vector<8x32xf32> -> vector<8x32xf32>
    %99 = arith.addf %98, %3 : vector<8x32xf32>
    %c0_31 = arith.constant 0 : index
    %c0_32 = arith.constant 0 : index
    %c0_33 = arith.constant 0 : index
    %100 = vector.load %arg8[%c0_31, %c0_32, %c0_33] : memref<1x1x32xf32, #tpu.memory_space<vmem>>, vector<1x1x32xf32>
    %101 = vector.shape_cast %100 : vector<1x1x32xf32> to vector<1x32xf32>
    %c0_34 = arith.constant 0 : index
    %c0_35 = arith.constant 0 : index
    %c0_36 = arith.constant 0 : index
    %102 = vector.load %arg9[%c0_34, %c0_35, %c0_36] : memref<1x1x32xf32, #tpu.memory_space<vmem>>, vector<1x1x32xf32>
    %103 = vector.shape_cast %102 : vector<1x1x32xf32> to vector<1x32xf32>
    %cst_37 = arith.constant dense<0.000000e+00> : vector<8xf32>
    %104 = vector.multi_reduction <add>, %99, %cst_37 [1] : vector<8x32xf32> to vector<8xf32>
    %105 = vector.shape_cast %104 : vector<8xf32> to vector<8x1xf32>
    %cst_38 = arith.constant 3.200000e+01 : f32
    %106 = vector.broadcast %cst_38 : f32 to vector<8x1xf32>
    %107 = arith.divf %105, %106 : vector<8x1xf32>
    %108 = vector.broadcast %107 : vector<8x1xf32> to vector<8x32xf32>
    %109 = arith.subf %99, %108 : vector<8x32xf32>
    %110 = arith.mulf %109, %109 : vector<8x32xf32>
    %cst_39 = arith.constant dense<0.000000e+00> : vector<8xf32>
    %111 = vector.multi_reduction <add>, %110, %cst_39 [1] : vector<8x32xf32> to vector<8xf32>
    %112 = vector.shape_cast %111 : vector<8xf32> to vector<8x1xf32>
    %cst_40 = arith.constant 3.200000e+01 : f32
    %113 = vector.broadcast %cst_40 : f32 to vector<8x1xf32>
    %114 = arith.divf %112, %113 : vector<8x1xf32>
    %115 = vector.broadcast %107 : vector<8x1xf32> to vector<8x32xf32>
    %116 = arith.subf %99, %115 : vector<8x32xf32>
    %cst_41 = arith.constant 9.99999974E-6 : f32
    %117 = vector.broadcast %cst_41 : f32 to vector<8x1xf32>
    %118 = arith.addf %114, %117 : vector<8x1xf32>
    %119 = math.rsqrt %118 : vector<8x1xf32>
    %120 = vector.broadcast %119 : vector<8x1xf32> to vector<8x32xf32>
    %121 = arith.mulf %116, %120 : vector<8x32xf32>
    %122 = vector.broadcast %101 : vector<1x32xf32> to vector<8x32xf32>
    %123 = arith.mulf %121, %122 : vector<8x32xf32>
    %124 = vector.broadcast %103 : vector<1x32xf32> to vector<8x32xf32>
    %125 = arith.addf %123, %124 : vector<8x32xf32>
    %126 = arith.truncf %125 : vector<8x32xf32> to vector<8x32xbf16>
    %c0_42 = arith.constant 0 : index
    %c0_43 = arith.constant 0 : index
    %c0_44 = arith.constant 0 : index
    %127 = vector.load %arg10[%c0_42, %c0_43, %c0_44] : memref<1x32x128xbf16, #tpu.memory_space<vmem>>, vector<1x32x128xbf16>
    %128 = vector.shape_cast %127 : vector<1x32x128xbf16> to vector<32x128xbf16>
    %cst_45 = arith.constant dense<0.000000e+00> : vector<8x128xf32>
    %129 = tpu.matmul %126, %128, %cst_45 {dimension_numbers = #tpu.dot_dimension_numbers<[1], [0], [0], [1], [0, 0, 1, 1], [], []>} : vector<8x32xbf16>, vector<32x128xbf16>, vector<8x128xf32> -> vector<8x128xf32>
    %c0_46 = arith.constant 0 : index
    %c0_47 = arith.constant 0 : index
    %c0_48 = arith.constant 0 : index
    %130 = vector.load %arg11[%c0_46, %c0_47, %c0_48] : memref<1x1x128xf32, #tpu.memory_space<vmem>>, vector<1x1x128xf32>
    %131 = vector.shape_cast %130 : vector<1x1x128xf32> to vector<1x128xf32>
    %132 = vector.broadcast %131 : vector<1x128xf32> to vector<8x128xf32>
    %133 = arith.addf %129, %132 : vector<8x128xf32>
    %cst_49 = arith.constant 0.000000e+00 : f32
    %134 = vector.broadcast %cst_49 : f32 to vector<8x128xf32>
    %135 = arith.maximumf %133, %134 : vector<8x128xf32>
    %136 = arith.truncf %135 : vector<8x128xf32> to vector<8x128xbf16>
    %c0_50 = arith.constant 0 : index
    %c0_51 = arith.constant 0 : index
    %c0_52 = arith.constant 0 : index
    %137 = vector.load %arg12[%c0_50, %c0_51, %c0_52] : memref<1x128x32xbf16, #tpu.memory_space<vmem>>, vector<1x128x32xbf16>
    %138 = vector.shape_cast %137 : vector<1x128x32xbf16> to vector<128x32xbf16>
    %cst_53 = arith.constant dense<0.000000e+00> : vector<8x32xf32>
    %139 = tpu.matmul %136, %138, %cst_53 {dimension_numbers = #tpu.dot_dimension_numbers<[1], [0], [0], [1], [0, 0, 1, 1], [], []>} : vector<8x128xbf16>, vector<128x32xbf16>, vector<8x32xf32> -> vector<8x32xf32>
    %c0_54 = arith.constant 0 : index
    %c0_55 = arith.constant 0 : index
    %c0_56 = arith.constant 0 : index
    %140 = vector.load %arg13[%c0_54, %c0_55, %c0_56] : memref<1x1x32xf32, #tpu.memory_space<vmem>>, vector<1x1x32xf32>
    %141 = vector.shape_cast %140 : vector<1x1x32xf32> to vector<1x32xf32>
    %142 = vector.broadcast %141 : vector<1x32xf32> to vector<8x32xf32>
    %143 = arith.addf %139, %142 : vector<8x32xf32>
    %144 = arith.addf %143, %99 : vector<8x32xf32>
    %c1_i32 = arith.constant 1 : i32
    %145 = arith.cmpi slt, %arg1, %c1_i32 : i32
    %146 = arith.extui %145 : i1 to i32
    %c0_i32_57 = arith.constant 0 : i32
    %147 = arith.cmpi ne, %146, %c0_i32_57 : i32
    scf.if %147 {
      %c0_60 = arith.constant 0 : index
      %c0_61 = arith.constant 0 : index
      %151 = vector.load %arg15[%c0_60, %c0_61] : memref<8x32xf32, #tpu.memory_space<vmem>>, vector<8x32xf32>
      tpu.vector_store %arg15[%c0_60, %c0_61], %144 {strides = array<i32>} : memref<8x32xf32, #tpu.memory_space<vmem>>, vector<8x32xf32>,
    } else {
    }
    %c1_i32_58 = arith.constant 1 : i32
    %148 = arith.cmpi eq, %arg1, %c1_i32_58 : i32
    %149 = arith.extui %148 : i1 to i32
    %c0_i32_59 = arith.constant 0 : i32
    %150 = arith.cmpi ne, %149, %c0_i32_59 : i32
    scf.if %150 {
      %151 = vector.shape_cast %144 : vector<8x32xf32> to vector<1x8x32xf32>
      %152 = arith.truncf %151 : vector<1x8x32xf32> to vector<1x8x32xbf16>
      %c0_60 = arith.constant 0 : index
      %c0_61 = arith.constant 0 : index
      %c0_62 = arith.constant 0 : index
      %153 = vector.load %arg14[%c0_60, %c0_61, %c0_62] : memref<1x8x32xbf16, #tpu.memory_space<vmem>>, vector<1x8x32xbf16>
      tpu.vector_store %arg14[%c0_60, %c0_61, %c0_62], %152 {strides = array<i32>} : memref<1x8x32xbf16, #tpu.memory_space<vmem>>, vector<1x8x32xbf16>,
    } else {
    }
    return
  }
  func.func @transform_0(%arg0: i32, %arg1: i32) -> (i32, i32, i32) {
    %c0_i32 = arith.constant 0 : i32
    %c0_i32_0 = arith.constant 0 : i32
    %c0_i32_1 = arith.constant 0 : i32
    return %arg0, %c0_i32, %c0_i32_0 : i32, i32, i32
  }
  func.func @transform_1(%arg0: i32, %arg1: i32) -> (i32, i32) {
    %c0_i32 = arith.constant 0 : i32
    %c0_i32_0 = arith.constant 0 : i32
    %c0_i32_1 = arith.constant 0 : i32
    return %c0_i32, %c0_i32_0 : i32, i32
  }
  func.func @transform_2(%arg0: i32, %arg1: i32) -> (i32, i32, i32) {
    %c0_i32 = arith.constant 0 : i32
    %c0_i32_0 = arith.constant 0 : i32
    %c0_i32_1 = arith.constant 0 : i32
    return %arg1, %c0_i32, %c0_i32_0 : i32, i32, i32
  }
  func.func @transform_3(%arg0: i32, %arg1: i32) -> (i32, i32, i32) {
    %c0_i32 = arith.constant 0 : i32
    %c0_i32_0 = arith.constant 0 : i32
    %c0_i32_1 = arith.constant 0 : i32
    return %arg1, %c0_i32, %c0_i32_0 : i32, i32, i32
  }
  func.func @transform_4(%arg0: i32, %arg1: i32) -> (i32, i32, i32) {
    %c0_i32 = arith.constant 0 : i32
    %c0_i32_0 = arith.constant 0 : i32
    %c0_i32_1 = arith.constant 0 : i32
    return %arg1, %c0_i32, %c0_i32_0 : i32, i32, i32
  }
  func.func @transform_5(%arg0: i32, %arg1: i32) -> (i32, i32, i32) {
    %c0_i32 = arith.constant 0 : i32
    %c0_i32_0 = arith.constant 0 : i32
    %c0_i32_1 = arith.constant 0 : i32
    return %arg1, %c0_i32, %c0_i32_0 : i32, i32, i32
  }
  func.func @transform_6(%arg0: i32, %arg1: i32) -> (i32, i32, i32) {
    %c0_i32 = arith.constant 0 : i32
    %c0_i32_0 = arith.constant 0 : i32
    %c0_i32_1 = arith.constant 0 : i32
    return %arg1, %c0_i32, %c0_i32_0 : i32, i32, i32
  }
  func.func @transform_7(%arg0: i32, %arg1: i32) -> (i32, i32, i32) {
    %c0_i32 = arith.constant 0 : i32
    %c0_i32_0 = arith.constant 0 : i32
    %c0_i32_1 = arith.constant 0 : i32
    return %arg1, %c0_i32, %c0_i32_0 : i32, i32, i32
  }
  func.func @transform_8(%arg0: i32, %arg1: i32) -> (i32, i32, i32) {
    %c0_i32 = arith.constant 0 : i32
    %c0_i32_0 = arith.constant 0 : i32
    %c0_i32_1 = arith.constant 0 : i32
    return %arg1, %c0_i32, %c0_i32_0 : i32, i32, i32
  }
  func.func @transform_9(%arg0: i32, %arg1: i32) -> (i32, i32, i32) {
    %c0_i32 = arith.constant 0 : i32
    %c0_i32_0 = arith.constant 0 : i32
    %c0_i32_1 = arith.constant 0 : i32
    return %arg1, %c0_i32, %c0_i32_0 : i32, i32, i32
  }
  func.func @transform_10(%arg0: i32, %arg1: i32) -> (i32, i32, i32) {
    %c0_i32 = arith.constant 0 : i32
    %c0_i32_0 = arith.constant 0 : i32
    %c0_i32_1 = arith.constant 0 : i32
    return %arg1, %c0_i32, %c0_i32_0 : i32, i32, i32
  }
  func.func @transform_11(%arg0: i32, %arg1: i32) -> (i32, i32, i32) {
    %c0_i32 = arith.constant 0 : i32
    %c0_i32_0 = arith.constant 0 : i32
    %c0_i32_1 = arith.constant 0 : i32
    return %arg1, %c0_i32, %c0_i32_0 : i32, i32, i32
  }
  func.func @transform_12(%arg0: i32, %arg1: i32) -> (i32, i32, i32) {
    %c0_i32 = arith.constant 0 : i32
    %c0_i32_0 = arith.constant 0 : i32
    %c0_i32_1 = arith.constant 0 : i32
    return %arg0, %c0_i32, %c0_i32_0 : i32, i32, i32
  }
}

</mosaic_0001>

<llo_original>
// kernel: tpu_custom_call.1
$region0: #{tpu_custom_call.1}
  #allocation0 [shape = 'u32[]', space=smem, size = 0x4, offset = 0x4, fixed_abs, tag = 'smem constant byte address 0x4 - core index']
  #allocation1 [shape = 'u32[72,128]{1,0:T(1,128)}', space=vmem, size = 0x9000, scoped, tag = 'internal scratch']
  #allocation2 [shape = 'f32[8,32]{1,0:T(8,128)}', space=vmem, size = 0x1000, scoped, tag = 'scratch operand']
  %s0 = inlined_call_operand.vmem [shape: f32[2,8,32], index: 0, kind: input, shape index: {}]
  %s1 = inlined_call_operand.vmem [shape: f32[8,8], index: 1, kind: input, shape index: {}]
  %s2 = inlined_call_operand.vmem [shape: f32[2,1,32], index: 2, kind: input, shape index: {}]
  %s3 = inlined_call_operand.vmem [shape: f32[2,1,32], index: 3, kind: input, shape index: {}]
  %s4 = inlined_call_operand.vmem [shape: bf16[2,32,96], index: 4, kind: input, shape index: {}]
  %s5 = inlined_call_operand.vmem [shape: bf16[2,32,32], index: 5, kind: input, shape index: {}]
  %s6 = inlined_call_operand.vmem [shape: f32[2,1,32], index: 6, kind: input, shape index: {}]
  %s7 = inlined_call_operand.vmem [shape: f32[2,1,32], index: 7, kind: input, shape index: {}]
  %s8 = inlined_call_operand.vmem [shape: bf16[2,32,128], index: 8, kind: input, shape index: {}]
  %s9 = inlined_call_operand.vmem [shape: f32[2,1,128], index: 9, kind: input, shape index: {}]
  %s10 = inlined_call_operand.vmem [shape: bf16[2,128,32], index: 10, kind: input, shape index: {}]
  %s11 = inlined_call_operand.vmem [shape: f32[2,1,32], index: 11, kind: input, shape index: {}]
  %s12 = inlined_call_operand.hbm [shape: bf16[2,8,32], index: 12, kind: output, shape index: {}]
  %s13 = sld [smem:[#allocation0]]
  $region93: #{tpu_custom_call.1} parent=0
    _
  %s15 = ssub.s32 1, %s13
  %s16 = scalar_select 0, %s15, %s13
  $region1: #{tpu_custom_call.1} parent=0
    #allocation3 [shape = 'u8[4096]{0}', space=vmem, size = 0x1000, scoped, tag = 'output window, operand 0']
    #allocation4 [shape = 's32[2]{0}', space=sflag, size = 0x8, scoped, tag = 'scoped memory for tpu_custom_call.1']
    %17 = vsyncpa [#allocation4], 0
    %s18 = scalar_lea.sflag [#allocation4], 1
    %19 = vsyncpa %s18, 0
    loop: start=0, step=1, limit=6
    $region2: #{tpu_custom_call.1} parent=1 // loop_pre_header
      _
    $region3: #{tpu_custom_call.1} parent=1 // loop_header
      %s21 = sphi 0, %s25
      %p22 = scmp.ge.s32.totalorder %s21, 6
      %s28 = sphi 0, %s40
      %s29 = sphi 0, %s36
      %s30 = sphi 0, %s28
      %s31 = sphi 0, %s29
      %s32 = sphi 0, %s30
      %s33 = sphi 0, %s31
      %s43 = sphi 0, %s45
      %s46 = sphi 0, %s43
      %s47 = sphi 0, %s46
      %s63 = sphi 0, %s47
      %s67 = sphi 0, %s67
      %s69 = sphi 0, %s67
      %s70 = sphi 0, %s69
      %s84 = sphi 0, %s70
      %s90 = sphi 0, %s92
      %s93 = sphi 0, %s90
      %s94 = sphi 0, %s93
      %s110 = sphi 0, %s94
      %s116 = sphi 0, %s118
      %s119 = sphi 0, %s116
      %s120 = sphi 0, %s119
      %s136 = sphi 0, %s120
      %s142 = sphi 0, %s144
      %s145 = sphi 0, %s142
      %s146 = sphi 0, %s145
      %s162 = sphi 0, %s146
      %s168 = sphi 0, %s170
      %s171 = sphi 0, %s168
      %s172 = sphi 0, %s171
      %s188 = sphi 0, %s172
      %s194 = sphi 0, %s196
      %s197 = sphi 0, %s194
      %s198 = sphi 0, %s197
      %s214 = sphi 0, %s198
      %s220 = sphi 0, %s222
      %s223 = sphi 0, %s220
      %s224 = sphi 0, %s223
      %s240 = sphi 0, %s224
      %s246 = sphi 0, %s248
      %s249 = sphi 0, %s246
      %s250 = sphi 0, %s249
      %s266 = sphi 0, %s250
      %s272 = sphi 0, %s274
      %s275 = sphi 0, %s272
      %s276 = sphi 0, %s275
      %s292 = sphi 0, %s276
      %s298 = sphi 0, %s300
      %s301 = sphi 0, %s298
      %s302 = sphi 0, %s301
      %s318 = sphi 0, %s302
      %s324 = sphi 0, %s326
      %s327 = sphi 0, %s324
      %s328 = sphi 0, %s327
      %s344 = sphi 0, %s328
      %s350 = sphi 0, %s352
      %s353 = sphi 0, %s350
      %s354 = sphi 0, %s353
      %s370 = sphi 0, %s354
    $region4: #{tpu_custom_call.1} parent=1 // loop_header_branch
      %24 = sbr.rel (%p22) target = $region8
    $region5: #{tpu_custom_call.1} parent=1 // loop_body
      %s26 = ssub.s32 %s21, 1
      %s27 = ssub.s32 %s21, 2
      %s34 = sadd.s32 1, %s29
      %p35 = scmp.ge.s32.totalorder %s34, 2
      %s36 = scalar_select %p35, 0, %s34
      %s37 = sadd.s32 1, %s28
      %s38 = scalar_select %p35, %s37, %s28
      %p39 = scmp.ge.s32.totalorder %s38, 2
      %s40 = scalar_select %p39, 0, %s38
      %s41 = ssub.s32 %s28, %s40
      %p42 = scmp.eq.s32.totalorder %s41, 0
      %s44 = sadd.s32 %s43, 1
      %s45 = scalar_select %p42, %s43, %s44
      %p48 = pneg %p42
      %p49 = scmp.eq.s32.totalorder %s21, 3
      %p50 = por %p48, %p49
      %p51 = scmp.ne.s32.totalorder %s43, %s46
      %p52 = scmp.eq.s32.totalorder %s21, 0
      %p53 = por %p51, %p52
      %p54 = scmp.ne.s32.totalorder %s43, %s46
      %p55 = scmp.eq.s32.totalorder %s26, 3
      %p56 = por %p54, %p55
      %p57 = scmp.ne.s32.totalorder %s46, %s47
      %p58 = scmp.eq.s32.totalorder %s26, 0
      %p59 = por %p57, %p58
      %p60 = scmp.ne.s32.totalorder %s46, %s47
      %p61 = scmp.eq.s32.totalorder %s27, 3
      %p62 = por %p60, %p61
      %p64 = scmp.ne.s32.totalorder %s47, %s63
      %p65 = scmp.eq.s32.totalorder %s27, 0
      %p66 = por %p64, %p65
      %s68 = sadd.s32 %s67, 1
      %p71 = scmp.eq.s32.totalorder %s21, 3
      %p72 = scmp.ne.s32.totalorder %s67, %s69
      %p73 = scmp.eq.s32.totalorder %s21, 0
      %p74 = por %p72, %p73
      %p75 = scmp.ne.s32.totalorder %s67, %s69
      %p76 = scmp.eq.s32.totalorder %s26, 3
      %p77 = por %p75, %p76
      %p78 = scmp.ne.s32.totalorder %s69, %s70
      %p79 = scmp.eq.s32.totalorder %s26, 0
      %p80 = por %p78, %p79
      %p81 = scmp.ne.s32.totalorder %s69, %s70
      %p82 = scmp.eq.s32.totalorder %s27, 3
      %p83 = por %p81, %p82
      %p85 = scmp.ne.s32.totalorder %s70, %s84
      %p86 = scmp.eq.s32.totalorder %s27, 0
      %p87 = por %p85, %p86
      %s88 = ssub.s32 %s29, %s36
      %p89 = scmp.eq.s32.totalorder %s88, 0
      %s91 = sadd.s32 %s90, 1
      %s92 = scalar_select %p89, %s90, %s91
      %p95 = pneg %p89
      %p96 = scmp.eq.s32.totalorder %s21, 3
      %p97 = por %p95, %p96
      %p98 = scmp.ne.s32.totalorder %s90, %s93
      %p99 = scmp.eq.s32.totalorder %s21, 0
      %p100 = por %p98, %p99
      %p101 = scmp.ne.s32.totalorder %s90, %s93
      %p102 = scmp.eq.s32.totalorder %s26, 3
      %p103 = por %p101, %p102
      %p104 = scmp.ne.s32.totalorder %s93, %s94
      %p105 = scmp.eq.s32.totalorder %s26, 0
      %p106 = por %p104, %p105
      %p107 = scmp.ne.s32.totalorder %s93, %s94
      %p108 = scmp.eq.s32.totalorder %s27, 3
      %p109 = por %p107, %p108
      %p111 = scmp.ne.s32.totalorder %s94, %s110
      %p112 = scmp.eq.s32.totalorder %s27, 0
      %p113 = por %p111, %p112
      %s114 = ssub.s32 %s29, %s36
      %p115 = scmp.eq.s32.totalorder %s114, 0
      %s117 = sadd.s32 %s116, 1
      %s118 = scalar_select %p115, %s116, %s117
      %p121 = pneg %p115
      %p122 = scmp.eq.s32.totalorder %s21, 3
      %p123 = por %p121, %p122
      %p124 = scmp.ne.s32.totalorder %s116, %s119
      %p125 = scmp.eq.s32.totalorder %s21, 0
      %p126 = por %p124, %p125
      %p127 = scmp.ne.s32.totalorder %s116, %s119
      %p128 = scmp.eq.s32.totalorder %s26, 3
      %p129 = por %p127, %p128
      %p130 = scmp.ne.s32.totalorder %s119, %s120
      %p131 = scmp.eq.s32.totalorder %s26, 0
      %p132 = por %p130, %p131
      %p133 = scmp.ne.s32.totalorder %s119, %s120
      %p134 = scmp.eq.s32.totalorder %s27, 3
      %p135 = por %p133, %p134
      %p137 = scmp.ne.s32.totalorder %s120, %s136
      %p138 = scmp.eq.s32.totalorder %s27, 0
      %p139 = por %p137, %p138
      %s140 = ssub.s32 %s29, %s36
      %p141 = scmp.eq.s32.totalorder %s140, 0
      %s143 = sadd.s32 %s142, 1
      %s144 = scalar_select %p141, %s142, %s143
      %p147 = pneg %p141
      %p148 = scmp.eq.s32.totalorder %s21, 3
      %p149 = por %p147, %p148
      %p150 = scmp.ne.s32.totalorder %s142, %s145
      %p151 = scmp.eq.s32.totalorder %s21, 0
      %p152 = por %p150, %p151
      %p153 = scmp.ne.s32.totalorder %s142, %s145
      %p154 = scmp.eq.s32.totalorder %s26, 3
      %p155 = por %p153, %p154
      %p156 = scmp.ne.s32.totalorder %s145, %s146
      %p157 = scmp.eq.s32.totalorder %s26, 0
      %p158 = por %p156, %p157
      %p159 = scmp.ne.s32.totalorder %s145, %s146
      %p160 = scmp.eq.s32.totalorder %s27, 3
      %p161 = por %p159, %p160
      %p163 = scmp.ne.s32.totalorder %s146, %s162
      %p164 = scmp.eq.s32.totalorder %s27, 0
      %p165 = por %p163, %p164
      %s166 = ssub.s32 %s29, %s36
      %p167 = scmp.eq.s32.totalorder %s166, 0
      %s169 = sadd.s32 %s168, 1
      %s170 = scalar_select %p167, %s168, %s169
      %p173 = pneg %p167
      %p174 = scmp.eq.s32.totalorder %s21, 3
      %p175 = por %p173, %p174
      %p176 = scmp.ne.s32.totalorder %s168, %s171
      %p177 = scmp.eq.s32.totalorder %s21, 0
      %p178 = por %p176, %p177
      %p179 = scmp.ne.s32.totalorder %s168, %s171
      %p180 = scmp.eq.s32.totalorder %s26, 3
      %p181 = por %p179, %p180
      %p182 = scmp.ne.s32.totalorder %s171, %s172
      %p183 = scmp.eq.s32.totalorder %s26, 0
      %p184 = por %p182, %p183
      %p185 = scmp.ne.s32.totalorder %s171, %s172
      %p186 = scmp.eq.s32.totalorder %s27, 3
      %p187 = por %p185, %p186
      %p189 = scmp.ne.s32.totalorder %s172, %s188
      %p190 = scmp.eq.s32.totalorder %s27, 0
      %p191 = por %p189, %p190
      %s192 = ssub.s32 %s29, %s36
      %p193 = scmp.eq.s32.totalorder %s192, 0
      %s195 = sadd.s32 %s194, 1
      %s196 = scalar_select %p193, %s194, %s195
      %p199 = pneg %p193
      %p200 = scmp.eq.s32.totalorder %s21, 3
      %p201 = por %p199, %p200
      %p202 = scmp.ne.s32.totalorder %s194, %s197
      %p203 = scmp.eq.s32.totalorder %s21, 0
      %p204 = por %p202, %p203
      %p205 = scmp.ne.s32.totalorder %s194, %s197
      %p206 = scmp.eq.s32.totalorder %s26, 3
      %p207 = por %p205, %p206
      %p208 = scmp.ne.s32.totalorder %s197, %s198
      %p209 = scmp.eq.s32.totalorder %s26, 0
      %p210 = por %p208, %p209
      %p211 = scmp.ne.s32.totalorder %s197, %s198
      %p212 = scmp.eq.s32.totalorder %s27, 3
      %p213 = por %p211, %p212
      %p215 = scmp.ne.s32.totalorder %s198, %s214
      %p216 = scmp.eq.s32.totalorder %s27, 0
      %p217 = por %p215, %p216
      %s218 = ssub.s32 %s29, %s36
      %p219 = scmp.eq.s32.totalorder %s218, 0
      %s221 = sadd.s32 %s220, 1
      %s222 = scalar_select %p219, %s220, %s221
      %p225 = pneg %p219
      %p226 = scmp.eq.s32.totalorder %s21, 3
      %p227 = por %p225, %p226
      %p228 = scmp.ne.s32.totalorder %s220, %s223
      %p229 = scmp.eq.s32.totalorder %s21, 0
      %p230 = por %p228, %p229
      %p231 = scmp.ne.s32.totalorder %s220, %s223
      %p232 = scmp.eq.s32.totalorder %s26, 3
      %p233 = por %p231, %p232
      %p234 = scmp.ne.s32.totalorder %s223, %s224
      %p235 = scmp.eq.s32.totalorder %s26, 0
      %p236 = por %p234, %p235
      %p237 = scmp.ne.s32.totalorder %s223, %s224
      %p238 = scmp.eq.s32.totalorder %s27, 3
      %p239 = por %p237, %p238
      %p241 = scmp.ne.s32.totalorder %s224, %s240
      %p242 = scmp.eq.s32.totalorder %s27, 0
      %p243 = por %p241, %p242
      %s244 = ssub.s32 %s29, %s36
      %p245 = scmp.eq.s32.totalorder %s244, 0
      %s247 = sadd.s32 %s246, 1
      %s248 = scalar_select %p245, %s246, %s247
      %p251 = pneg %p245
      %p252 = scmp.eq.s32.totalorder %s21, 3
      %p253 = por %p251, %p252
      %p254 = scmp.ne.s32.totalorder %s246, %s249
      %p255 = scmp.eq.s32.totalorder %s21, 0
      %p256 = por %p254, %p255
      %p257 = scmp.ne.s32.totalorder %s246, %s249
      %p258 = scmp.eq.s32.totalorder %s26, 3
      %p259 = por %p257, %p258
      %p260 = scmp.ne.s32.totalorder %s249, %s250
      %p261 = scmp.eq.s32.totalorder %s26, 0
      %p262 = por %p260, %p261
      %p263 = scmp.ne.s32.totalorder %s249, %s250
      %p264 = scmp.eq.s32.totalorder %s27, 3
      %p265 = por %p263, %p264
      %p267 = scmp.ne.s32.totalorder %s250, %s266
      %p268 = scmp.eq.s32.totalorder %s27, 0
      %p269 = por %p267, %p268
      %s270 = ssub.s32 %s29, %s36
      %p271 = scmp.eq.s32.totalorder %s270, 0
      %s273 = sadd.s32 %s272, 1
      %s274 = scalar_select %p271, %s272, %s273
      %p277 = pneg %p271
      %p278 = scmp.eq.s32.totalorder %s21, 3
      %p279 = por %p277, %p278
      %p280 = scmp.ne.s32.totalorder %s272, %s275
      %p281 = scmp.eq.s32.totalorder %s21, 0
      %p282 = por %p280, %p281
      %p283 = scmp.ne.s32.totalorder %s272, %s275
      %p284 = scmp.eq.s32.totalorder %s26, 3
      %p285 = por %p283, %p284
      %p286 = scmp.ne.s32.totalorder %s275, %s276
      %p287 = scmp.eq.s32.totalorder %s26, 0
      %p288 = por %p286, %p287
      %p289 = scmp.ne.s32.totalorder %s275, %s276
      %p290 = scmp.eq.s32.totalorder %s27, 3
      %p291 = por %p289, %p290
      %p293 = scmp.ne.s32.totalorder %s276, %s292
      %p294 = scmp.eq.s32.totalorder %s27, 0
      %p295 = por %p293, %p294
      %s296 = ssub.s32 %s29, %s36
      %p297 = scmp.eq.s32.totalorder %s296, 0
      %s299 = sadd.s32 %s298, 1
      %s300 = scalar_select %p297, %s298, %s299
      %p303 = pneg %p297
      %p304 = scmp.eq.s32.totalorder %s21, 3
      %p305 = por %p303, %p304
      %p306 = scmp.ne.s32.totalorder %s298, %s301
      %p307 = scmp.eq.s32.totalorder %s21, 0
      %p308 = por %p306, %p307
      %p309 = scmp.ne.s32.totalorder %s298, %s301
      %p310 = scmp.eq.s32.totalorder %s26, 3
      %p311 = por %p309, %p310
      %p312 = scmp.ne.s32.totalorder %s301, %s302
      %p313 = scmp.eq.s32.totalorder %s26, 0
      %p314 = por %p312, %p313
      %p315 = scmp.ne.s32.totalorder %s301, %s302
      %p316 = scmp.eq.s32.totalorder %s27, 3
      %p317 = por %p315, %p316
      %p319 = scmp.ne.s32.totalorder %s302, %s318
      %p320 = scmp.eq.s32.totalorder %s27, 0
      %p321 = por %p319, %p320
      %s322 = ssub.s32 %s29, %s36
      %p323 = scmp.eq.s32.totalorder %s322, 0
      %s325 = sadd.s32 %s324, 1
      %s326 = scalar_select %p323, %s324, %s325
      %p329 = pneg %p323
      %p330 = scmp.eq.s32.totalorder %s21, 3
      %p331 = por %p329, %p330
      %p332 = scmp.ne.s32.totalorder %s324, %s327
      %p333 = scmp.eq.s32.totalorder %s21, 0
      %p334 = por %p332, %p333
      %p335 = scmp.ne.s32.totalorder %s324, %s327
      %p336 = scmp.eq.s32.totalorder %s26, 3
      %p337 = por %p335, %p336
      %p338 = scmp.ne.s32.totalorder %s327, %s328
      %p339 = scmp.eq.s32.totalorder %s26, 0
      %p340 = por %p338, %p339
      %p341 = scmp.ne.s32.totalorder %s327, %s328
      %p342 = scmp.eq.s32.totalorder %s27, 3
      %p343 = por %p341, %p342
      %p345 = scmp.ne.s32.totalorder %s328, %s344
      %p346 = scmp.eq.s32.totalorder %s27, 0
      %p347 = por %p345, %p346
      %s348 = ssub.s32 %s28, %s40
      %p349 = scmp.eq.s32.totalorder %s348, 0
      %s351 = sadd.s32 %s350, 1
      %s352 = scalar_select %p349, %s350, %s351
      %p355 = pneg %p349
      %p356 = scmp.eq.s32.totalorder %s21, 3
      %p357 = por %p355, %p356
      %p358 = scmp.ne.s32.totalorder %s350, %s353
      %p359 = scmp.eq.s32.totalorder %s21, 0
      %p360 = por %p358, %p359
      %p361 = scmp.ne.s32.totalorder %s350, %s353
      %p362 = scmp.eq.s32.totalorder %s26, 3
      %p363 = por %p361, %p362
      %p364 = scmp.ne.s32.totalorder %s353, %s354
      %p365 = scmp.eq.s32.totalorder %s26, 0
      %p366 = por %p364, %p365
      %p367 = scmp.ne.s32.totalorder %s353, %s354
      %p368 = scmp.eq.s32.totalorder %s27, 3
      %p369 = por %p367, %p368
      %p371 = scmp.ne.s32.totalorder %s354, %s370
      %p372 = scmp.eq.s32.totalorder %s27, 0
      %p373 = por %p371, %p372
      %p374 = scmp.le.s32.totalorder 1, %s21
      %p375 = scmp.lt.s32.totalorder %s21, 5
      %p376 = pnand %p374, %p375
      %p377 = pneg %p376
      // Predicated region
      $region9: #{tpu_custom_call.1} parent=5 // pred_check
        _
      $region10: #{tpu_custom_call.1} parent=5 // pred_check_branch
        %379 = sbr.rel (%p376) target = $region12
      $region11: #{tpu_custom_call.1} parent=5 // pred_region
        %s380 = ssub.s32 %s21, 1
        // Predicated region
        $region13: #{tpu_custom_call.1} parent=11 // pred_check
          %p381 = pneg %p80
        $region14: #{tpu_custom_call.1} parent=11 // pred_check_branch
          %383 = sbr.rel (%p381) target = $region16
        $region15: #{tpu_custom_call.1} parent=11 // pred_region
          _
        $region16: #{tpu_custom_call.1} parent=11 // pred_fallthru
          _
      $region12: #{tpu_custom_call.1} parent=5 // pred_fallthru
        _
      %p384 = scmp.lt.s32.totalorder %s21, 4
      // Predicated region
      $region17: #{tpu_custom_call.1} parent=5 // pred_check
        %p385 = pneg %p384
      $region18: #{tpu_custom_call.1} parent=5 // pred_check_branch
        %387 = sbr.rel (%p385) target = $region20
      $region19: #{tpu_custom_call.1} parent=5 // pred_region
        // Predicated region
        $region21: #{tpu_custom_call.1} parent=19 // pred_check
          %p388 = pneg %p53
        $region22: #{tpu_custom_call.1} parent=19 // pred_check_branch
          %390 = sbr.rel (%p388) target = $region24
        $region23: #{tpu_custom_call.1} parent=19 // pred_region
          %p391 = scmp.lt.s32.totalorder %s28, 1
          %s392 = scalar_select %p391, %s28, 1
          %s393 = smul.addr %s392, 8
          %s394 = scalar_lea.vmem %s0, %s393
        $region24: #{tpu_custom_call.1} parent=19 // pred_fallthru
          _
        // Predicated region
        $region25: #{tpu_custom_call.1} parent=19 // pred_check
          %p395 = pneg %p100
        $region26: #{tpu_custom_call.1} parent=19 // pred_check_branch
          %397 = sbr.rel (%p395) target = $region28
        $region27: #{tpu_custom_call.1} parent=19 // pred_region
          %p398 = scmp.lt.s32.totalorder %s29, 1
          %s399 = scalar_select %p398, %s29, 1
          %s400 = scalar_lea.vmem %s2, %s399
        $region28: #{tpu_custom_call.1} parent=19 // pred_fallthru
          _
        // Predicated region
        $region29: #{tpu_custom_call.1} parent=19 // pred_check
          %p401 = pneg %p126
        $region30: #{tpu_custom_call.1} parent=19 // pred_check_branch
          %403 = sbr.rel (%p401) target = $region32
        $region31: #{tpu_custom_call.1} parent=19 // pred_region
          %p404 = scmp.lt.s32.totalorder %s29, 1
          %s405 = scalar_select %p404, %s29, 1
          %s406 = scalar_lea.vmem %s3, %s405
        $region32: #{tpu_custom_call.1} parent=19 // pred_fallthru
          _
        // Predicated region
        $region33: #{tpu_custom_call.1} parent=19 // pred_check
          %p407 = pneg %p152
        $region34: #{tpu_custom_call.1} parent=19 // pred_check_branch
          %409 = sbr.rel (%p407) target = $region36
        $region35: #{tpu_custom_call.1} parent=19 // pred_region
          %p410 = scmp.lt.s32.totalorder %s29, 1
          %s411 = scalar_select %p410, %s29, 1
          %s412 = smul.addr %s411, 4
          %s413 = smul.addr %s412, 4
          %s414 = scalar_lea.vmem %s4, %s413
        $region36: #{tpu_custom_call.1} parent=19 // pred_fallthru
          _
        // Predicated region
        $region37: #{tpu_custom_call.1} parent=19 // pred_check
          %p415 = pneg %p178
        $region38: #{tpu_custom_call.1} parent=19 // pred_check_branch
          %417 = sbr.rel (%p415) target = $region40
        $region39: #{tpu_custom_call.1} parent=19 // pred_region
          %p418 = scmp.lt.s32.totalorder %s29, 1
          %s419 = scalar_select %p418, %s29, 1
          %s420 = smul.addr %s419, 4
          %s421 = smul.addr %s420, 4
          %s422 = scalar_lea.vmem %s5, %s421
        $region40: #{tpu_custom_call.1} parent=19 // pred_fallthru
          _
        // Predicated region
        $region41: #{tpu_custom_call.1} parent=19 // pred_check
          %p423 = pneg %p204
        $region42: #{tpu_custom_call.1} parent=19 // pred_check_branch
          %425 = sbr.rel (%p423) target = $region44
        $region43: #{tpu_custom_call.1} parent=19 // pred_region
          %p426 = scmp.lt.s32.totalorder %s29, 1
          %s427 = scalar_select %p426, %s29, 1
          %s428 = scalar_lea.vmem %s6, %s427
        $region44: #{tpu_custom_call.1} parent=19 // pred_fallthru
          _
        // Predicated region
        $region45: #{tpu_custom_call.1} parent=19 // pred_check
          %p429 = pneg %p230
        $region46: #{tpu_custom_call.1} parent=19 // pred_check_branch
          %431 = sbr.rel (%p429) target = $region48
        $region47: #{tpu_custom_call.1} parent=19 // pred_region
          %p432 = scmp.lt.s32.totalorder %s29, 1
          %s433 = scalar_select %p432, %s29, 1
          %s434 = scalar_lea.vmem %s7, %s433
        $region48: #{tpu_custom_call.1} parent=19 // pred_fallthru
          _
        // Predicated region
        $region49: #{tpu_custom_call.1} parent=19 // pred_check
          %p435 = pneg %p256
        $region50: #{tpu_custom_call.1} parent=19 // pred_check_branch
          %437 = sbr.rel (%p435) target = $region52
        $region51: #{tpu_custom_call.1} parent=19 // pred_region
          %p438 = scmp.lt.s32.totalorder %s29, 1
          %s439 = scalar_select %p438, %s29, 1
          %s440 = smul.addr %s439, 4
          %s441 = smul.addr %s440, 4
          %s442 = scalar_lea.vmem %s8, %s441
        $region52: #{tpu_custom_call.1} parent=19 // pred_fallthru
          _
        // Predicated region
        $region53: #{tpu_custom_call.1} parent=19 // pred_check
          %p443 = pneg %p282
        $region54: #{tpu_custom_call.1} parent=19 // pred_check_branch
          %445 = sbr.rel (%p443) target = $region56
        $region55: #{tpu_custom_call.1} parent=19 // pred_region
          %p446 = scmp.lt.s32.totalorder %s29, 1
          %s447 = scalar_select %p446, %s29, 1
          %s448 = scalar_lea.vmem %s9, %s447
        $region56: #{tpu_custom_call.1} parent=19 // pred_fallthru
          _
        // Predicated region
        $region57: #{tpu_custom_call.1} parent=19 // pred_check
          %p449 = pneg %p308
        $region58: #{tpu_custom_call.1} parent=19 // pred_check_branch
          %451 = sbr.rel (%p449) target = $region60
        $region59: #{tpu_custom_call.1} parent=19 // pred_region
          %p452 = scmp.lt.s32.totalorder %s29, 1
          %s453 = scalar_select %p452, %s29, 1
          %s454 = smul.addr %s453, 16
          %s455 = smul.addr %s454, 4
          %s456 = scalar_lea.vmem %s10, %s455
        $region60: #{tpu_custom_call.1} parent=19 // pred_fallthru
          _
        // Predicated region
        $region61: #{tpu_custom_call.1} parent=19 // pred_check
          %p457 = pneg %p334
        $region62: #{tpu_custom_call.1} parent=19 // pred_check_branch
          %459 = sbr.rel (%p457) target = $region64
        $region63: #{tpu_custom_call.1} parent=19 // pred_region
          %p460 = scmp.lt.s32.totalorder %s29, 1
          %s461 = scalar_select %p460, %s29, 1
          %s462 = scalar_lea.vmem %s11, %s461
        $region64: #{tpu_custom_call.1} parent=19 // pred_fallthru
          _
      $region20: #{tpu_custom_call.1} parent=5 // pred_fallthru
        _
      %p463 = scmp.le.s32.totalorder 1, %s21
      %p464 = scmp.lt.s32.totalorder %s21, 5
      %p465 = pnand %p463, %p464
      %p466 = pneg %p465
      // Predicated region
      $region65: #{tpu_custom_call.1} parent=5 // pred_check
        _
      $region66: #{tpu_custom_call.1} parent=5 // pred_check_branch
        %468 = sbr.rel (%p465) target = $region68
      $region67: #{tpu_custom_call.1} parent=5 // pred_region
        %s469 = ssub.s32 %s21, 1
        %p470 = scmp.lt.s32.totalorder %s30, 1
        %s471 = scalar_select %p470, %s30, 1
        %s472 = smul.addr %s471, 8
        %s473 = scalar_lea.vmem %s0, %s472
        %p474 = pneg %p59
        %p475 = pneg %p56
        %p476 = pneg %p80
        %p477 = pneg %p77
        %p478 = scmp.lt.s32.totalorder %s31, 1
        %s479 = scalar_select %p478, %s31, 1
        %s480 = scalar_lea.vmem %s2, %s479
        %p481 = pneg %p106
        %p482 = pneg %p103
        %p483 = scmp.lt.s32.totalorder %s31, 1
        %s484 = scalar_select %p483, %s31, 1
        %s485 = scalar_lea.vmem %s3, %s484
        %p486 = pneg %p132
        %p487 = pneg %p129
        %p488 = scmp.lt.s32.totalorder %s31, 1
        %s489 = scalar_select %p488, %s31, 1
        %s490 = smul.addr %s489, 4
        %s491 = smul.addr %s490, 4
        %s492 = scalar_lea.vmem %s4, %s491
        %p493 = pneg %p158
        %p494 = pneg %p155
        %p495 = scmp.lt.s32.totalorder %s31, 1
        %s496 = scalar_select %p495, %s31, 1
        %s497 = smul.addr %s496, 4
        %s498 = smul.addr %s497, 4
        %s499 = scalar_lea.vmem %s5, %s498
        %p500 = pneg %p184
        %p501 = pneg %p181
        %p502 = scmp.lt.s32.totalorder %s31, 1
        %s503 = scalar_select %p502, %s31, 1
        %s504 = scalar_lea.vmem %s6, %s503
        %p505 = pneg %p210
        %p506 = pneg %p207
        %p507 = scmp.lt.s32.totalorder %s31, 1
        %s508 = scalar_select %p507, %s31, 1
        %s509 = scalar_lea.vmem %s7, %s508
        %p510 = pneg %p236
        %p511 = pneg %p233
        %p512 = scmp.lt.s32.totalorder %s31, 1
        %s513 = scalar_select %p512, %s31, 1
        %s514 = smul.addr %s513, 4
        %s515 = smul.addr %s514, 4
        %s516 = scalar_lea.vmem %s8, %s515
        %p517 = pneg %p262
        %p518 = pneg %p259
        %p519 = scmp.lt.s32.totalorder %s31, 1
        %s520 = scalar_select %p519, %s31, 1
        %s521 = scalar_lea.vmem %s9, %s520
        %p522 = pneg %p288
        %p523 = pneg %p285
        %p524 = scmp.lt.s32.totalorder %s31, 1
        %s525 = scalar_select %p524, %s31, 1
        %s526 = smul.addr %s525, 16
        %s527 = smul.addr %s526, 4
        %s528 = scalar_lea.vmem %s10, %s527
        %p529 = pneg %p314
        %p530 = pneg %p311
        %p531 = scmp.lt.s32.totalorder %s31, 1
        %s532 = scalar_select %p531, %s31, 1
        %s533 = scalar_lea.vmem %s11, %s532
        %p534 = pneg %p340
        %p535 = pneg %p337
        %p536 = pneg %p366
        %p537 = pneg %p363
        %s538 = sand.u32 %s353, 1
        %s539 = scalar_lea.sflag [#allocation4], %s538
        %s540 = sand.u32 %s353, 1
        %s541 = smul.addr %s540, 4
        %s542 = scalar_lea.vmem [#allocation3], %s541
        %p543 = scmp.lt.s32.totalorder %s30, 1
        %s544 = scalar_select %p543, %s30, 1
        %s545 = smul.addr %s544, 8
        %s546 = scalar_lea.vmem %s0, %s545
        %p547 = scmp.lt.s32.totalorder %s31, 1
        %s548 = scalar_select %p547, %s31, 1
        %s549 = scalar_lea.vmem %s2, %s548
        %p550 = scmp.lt.s32.totalorder %s31, 1
        %s551 = scalar_select %p550, %s31, 1
        %s552 = scalar_lea.vmem %s3, %s551
        %p553 = scmp.lt.s32.totalorder %s31, 1
        %s554 = scalar_select %p553, %s31, 1
        %s555 = smul.addr %s554, 4
        %s556 = smul.addr %s555, 4
        %s557 = scalar_lea.vmem %s4, %s556
        %p558 = scmp.lt.s32.totalorder %s31, 1
        %s559 = scalar_select %p558, %s31, 1
        %s560 = smul.addr %s559, 4
        %s561 = smul.addr %s560, 4
        %s562 = scalar_lea.vmem %s5, %s561
        %p563 = scmp.lt.s32.totalorder %s31, 1
        %s564 = scalar_select %p563, %s31, 1
        %s565 = scalar_lea.vmem %s6, %s564
        %p566 = scmp.lt.s32.totalorder %s31, 1
        %s567 = scalar_select %p566, %s31, 1
        %s568 = scalar_lea.vmem %s7, %s567
        %p569 = scmp.lt.s32.totalorder %s31, 1
        %s570 = scalar_select %p569, %s31, 1
        %s571 = smul.addr %s570, 4
        %s572 = smul.addr %s571, 4
        %s573 = scalar_lea.vmem %s8, %s572
        %p574 = scmp.lt.s32.totalorder %s31, 1
        %s575 = scalar_select %p574, %s31, 1
        %s576 = scalar_lea.vmem %s9, %s575
        %p577 = scmp.lt.s32.totalorder %s31, 1
        %s578 = scalar_select %p577, %s31, 1
        %s579 = smul.addr %s578, 16
        %s580 = smul.addr %s579, 4
        %s581 = scalar_lea.vmem %s10, %s580
        %p582 = scmp.lt.s32.totalorder %s31, 1
        %s583 = scalar_select %p582, %s31, 1
        %s584 = scalar_lea.vmem %s11, %s583
        %p586 = scmp.eq.s32.totalorder %s31, 0
        // Predicated region
        $region69: #{tpu_custom_call.1} parent=67 // pred_check
          %p587 = pneg %p586
        $region70: #{tpu_custom_call.1} parent=67 // pred_check_branch
          %589 = sbr.rel (%p587) target = $region72
        $region71: #{tpu_custom_call.1} parent=67 // pred_region
          %v590 = vld [vmem:[%s546] sm:$0xff]
          %vm591 = vcmask 261120
          %592 = vst.msk [vmem:[#allocation2] sm:$0xff] %vm591, %v590
        $region72: #{tpu_custom_call.1} parent=67 // pred_fallthru
          _
        %v593 = vld [vmem:[#allocation2] sm:$0xff]
        %v594 = vld [vmem:[%s549] sm:$0x1]
        %v595 = vld [vmem:[%s552] sm:$0x1]
        %vm596 = vcmask 261120
        %v597 = vsel %vm596, %v593, 0.0
        %598 = vadd.xlane.f32.xlu0 %v597
        %v599 = vpop.xlane.xlu0 %598
        %v600 = vrcp.pop 32.0
        %v601 = vmul.f32 32.0, %v600
        %v602 = vsub.f32 1.0, %v601
        %v603 = vmul.f32 %v600, %v602
        %v604 = vadd.f32 %v600, %v603
        %vm605 = vweird.f32 %v600
        %v606 = vsel %vm605, %v600, %v604
        %v607 = vmul.f32 %v599, %v606
        %v608 = vsub.f32 %v593, %v607
        %v609 = vmul.f32 %v608, %v608
        %v610 = vsel %vm596, %v609, 0.0
        %611 = vadd.xlane.f32.xlu0 %v610
        %v612 = vpop.xlane.xlu0 %611
        %v613 = vmul.f32 %v612, %v606
        %v614 = vadd.f32 %v613, 1e-05
        %v615 = vrsqrt.pop %v614
        %v616 = vmul.f32 %v615, %v614
        %v617 = vmul.f32 %v616, %v615
        %v618 = vmul.f32 0.5, %v617
        %v619 = vsub.f32 1.5, %v618
        %v620 = vmul.f32 %v615, %v619
        %vm621 = vweird.f32 %v614
        %vm622 = vweird.f32 %v615
        %vm623 = vmor %vm621, %vm622
        %v624 = vsel %vm623, %v615, %v620
        %v625 = vmul.f32 %v608, %v624
        %v627 = vperm.slane %v594, 0
        %v629 = vmul.f32 %v625, %v627
        %v631 = vperm.slane %v595, 0
        %v633 = vadd.f32 %v629, %v631
        %v634 = vpack.c.bf16 %v633, %v633
        %v635 = vld [vmem:[%s557] sm:$0xf]
        %v636 = vld [vmem:[%s557 + $0x4] sm:$0xf]
        %v637 = vld [vmem:[%s557 + $0x8] sm:$0xf]
        %v638 = vld [vmem:[%s557 + $0xc] sm:$0xf]
        %v643 = vunpack.c.l.b16 %v635
        %v644 = vunpack.c.l.b16 %v636
        %v645 = vunpack.c.l.b16 %v637
        %v646 = vunpack.c.l.b16 %v638
        %v647 = vpack.c.b16 %v644, %v643
        %v648 = vpack.c.b16 %v646, %v645
        %v652 = vsel %vm596, %v634, 0
        %654 = vmatpush.bf16.msra.mxu0 0
        %655 = vmatpush.bf16.msra.mxu0 0
        %656 = vmatpush.bf16.msra.mxu0 0
        %657 = vmatpush.bf16.msra.mxu0 0
        %658 = vmatpush.bf16.msra.mxu0 0
        %659 = vmatpush.bf16.msra.mxu0 0
        %660 = vmatpush.bf16.msra.mxu0 %v648
        %661 = vmatpush.bf16.msra.mxu0 %v647
        %662 = vmatmul.bf16.gmra.mxu0 %v652
        %v663 = vpop.f32.mrf.mxu0
        %v664 = vadd.f32 0.0, %v663
        %v665 = vpop.f32.mrf.mxu0
        %666 = vdwg.mxu0
        %668 = vrot.lane.b32.xlu0 %v664, 104
        %v669 = vpop.permute.xlu0 %668
        %671 = vrot.lane.b32.xlu0 %v664, 80
        %v672 = vpop.permute.xlu0 %671
        %674 = vrot.lane.b32.xlu0 %v664, 56
        %v675 = vpop.permute.xlu0 %674
        %v677 = vmul.f32 %v664, 0.35355338
        %v678 = vmul.f32 %v669, 0.35355338
        %v679 = vmul.f32 %v672, 0.35355338
        %v680 = vmul.f32 %v675, 0.35355338
        %v681 = vpack.c.bf16 %v677, %v677
        %v682 = vpack.c.bf16 %v678, %v678
        %v683 = vpack.c.bf16 %v679, %v679
        %v684 = vpack.c.bf16 %v680, %v680
        %v685 = vpack.c.bf16 %v664, %v664
        %v686 = vpack.c.bf16 %v669, %v669
        %v687 = vpack.c.bf16 %v672, %v672
        %v688 = vpack.c.bf16 %v675, %v675
        %v689 = vld [vmem:[%s1] sm:$0xff]
        %v691 = vunpack.c.l.b16 %v685
        %v692 = vpack.c.b16 %v691, %v691
        %693 = vrot.lane.b32.xlu0 %v692, 120
        %v694 = vpop.permute.xlu0 %693
        %vm695 = vcmask 64512
        %v697 = vsel %vm695, %v681, 0
        %v700 = vsel %vm695, %v694, 0
        %702 = vmatpush.bf16.xpose.msra.mxu0 0
        %703 = vmatpush.bf16.xpose.msra.mxu0 0
        %704 = vmatpush.bf16.xpose.msra.mxu0 0
        %705 = vmatpush.bf16.xpose.msra.mxu0 0
        %706 = vmatpush.bf16.xpose.msra.mxu0 0
        %707 = vmatpush.bf16.xpose.msra.mxu0 0
        %708 = vmatpush.bf16.xpose.msra.mxu0 0
        %709 = vmatpush.bf16.xpose.msra.mxu0 %v700
        %710 = vmatmul.bf16.gmra.mxu0 %v697
        %v711 = vpop.f32.mrf.mxu0
        %v712 = vadd.f32 %v689, %v711
        %v713 = vpop.f32.mrf.mxu0
        %714 = vdwg.mxu0
        %v716 = vunpack.c.l.b16 %v686
        %v717 = vpack.c.b16 %v716, %v716
        %718 = vrot.lane.b32.xlu0 %v717, 120
        %v719 = vpop.permute.xlu0 %718
        %v721 = vsel %vm695, %v682, 0
        %v724 = vsel %vm695, %v719, 0
        %726 = vmatpush.bf16.xpose.msra.mxu0 0
        %727 = vmatpush.bf16.xpose.msra.mxu0 0
        %728 = vmatpush.bf16.xpose.msra.mxu0 0
        %729 = vmatpush.bf16.xpose.msra.mxu0 0
        %730 = vmatpush.bf16.xpose.msra.mxu0 0
        %731 = vmatpush.bf16.xpose.msra.mxu0 0
        %732 = vmatpush.bf16.xpose.msra.mxu0 0
        %733 = vmatpush.bf16.xpose.msra.mxu0 %v724
        %734 = vmatmul.bf16.gmra.mxu0 %v721
        %v735 = vpop.f32.mrf.mxu0
        %v736 = vadd.f32 %v689, %v735
        %v737 = vpop.f32.mrf.mxu0
        %738 = vdwg.mxu0
        %v740 = vunpack.c.l.b16 %v687
        %v741 = vpack.c.b16 %v740, %v740
        %742 = vrot.lane.b32.xlu0 %v741, 120
        %v743 = vpop.permute.xlu0 %742
        %v745 = vsel %vm695, %v683, 0
        %v748 = vsel %vm695, %v743, 0
        %750 = vmatpush.bf16.xpose.msra.mxu0 0
        %751 = vmatpush.bf16.xpose.msra.mxu0 0
        %752 = vmatpush.bf16.xpose.msra.mxu0 0
        %753 = vmatpush.bf16.xpose.msra.mxu0 0
        %754 = vmatpush.bf16.xpose.msra.mxu0 0
        %755 = vmatpush.bf16.xpose.msra.mxu0 0
        %756 = vmatpush.bf16.xpose.msra.mxu0 0
        %757 = vmatpush.bf16.xpose.msra.mxu0 %v748
        %758 = vmatmul.bf16.gmra.mxu0 %v745
        %v759 = vpop.f32.mrf.mxu0
        %v760 = vadd.f32 %v689, %v759
        %v761 = vpop.f32.mrf.mxu0
        %762 = vdwg.mxu0
        %v764 = vunpack.c.l.b16 %v688
        %v765 = vpack.c.b16 %v764, %v764
        %766 = vrot.lane.b32.xlu0 %v765, 120
        %v767 = vpop.permute.xlu0 %766
        %v769 = vsel %vm695, %v684, 0
        %v772 = vsel %vm695, %v767, 0
        %774 = vmatpush.bf16.xpose.msra.mxu0 0
        %775 = vmatpush.bf16.xpose.msra.mxu0 0
        %776 = vmatpush.bf16.xpose.msra.mxu0 0
        %777 = vmatpush.bf16.xpose.msra.mxu0 0
        %778 = vmatpush.bf16.xpose.msra.mxu0 0
        %779 = vmatpush.bf16.xpose.msra.mxu0 0
        %780 = vmatpush.bf16.xpose.msra.mxu0 0
        %781 = vmatpush.bf16.xpose.msra.mxu0 %v772
        %782 = vmatmul.bf16.gmra.mxu0 %v769
        %v783 = vpop.f32.mrf.mxu0
        %v784 = vadd.f32 %v689, %v783
        %v785 = vpop.f32.mrf.mxu0
        %786 = vdwg.mxu0
        %v787 = vsel %vm695, %v712, -inf
        %788 = vmax.xlane.f32.xlu0 %v787
        %v789 = vpop.xlane.xlu0 %788
        %v790 = vsel %vm695, %v736, -inf
        %791 = vmax.xlane.f32.xlu0 %v790
        %v792 = vpop.xlane.xlu0 %791
        %v793 = vsel %vm695, %v760, -inf
        %794 = vmax.xlane.f32.xlu0 %v793
        %v795 = vpop.xlane.xlu0 %794
        %v796 = vsel %vm695, %v784, -inf
        %797 = vmax.xlane.f32.xlu0 %v796
        %v798 = vpop.xlane.xlu0 %797
        %v799 = vsub.f32 -inf, %v789
        %v800 = vsub.f32 -inf, %v792
        %v801 = vsub.f32 -inf, %v795
        %v802 = vsub.f32 -inf, %v798
        %v803 = vmul.f32 %v799, 1.442695
        %v804 = vpow.pop %v803
        %v805 = vmul.f32 %v800, 1.442695
        %v806 = vpow.pop %v805
        %v807 = vmul.f32 %v801, 1.442695
        %v808 = vpow.pop %v807
        %v809 = vmul.f32 %v802, 1.442695
        %v810 = vpow.pop %v809
        %v811 = vsub.f32 %v712, %v789
        %v812 = vsub.f32 %v736, %v792
        %v813 = vsub.f32 %v760, %v795
        %v814 = vsub.f32 %v784, %v798
        %v815 = vmul.f32 %v811, 1.442695
        %v816 = vpow.pop %v815
        %v817 = vmul.f32 %v812, 1.442695
        %v818 = vpow.pop %v817
        %v819 = vmul.f32 %v813, 1.442695
        %v820 = vpow.pop %v819
        %v821 = vmul.f32 %v814, 1.442695
        %v822 = vpow.pop %v821
        %v823 = vmul.f32 %v804, 0.0
        %v824 = vmul.f32 %v806, 0.0
        %v825 = vmul.f32 %v808, 0.0
        %v826 = vmul.f32 %v810, 0.0
        %v827 = vsel %vm695, %v816, 0.0
        %828 = vadd.xlane.f32.xlu0 %v827
        %v829 = vpop.xlane.xlu0 %828
        %v830 = vsel %vm695, %v818, 0.0
        %831 = vadd.xlane.f32.xlu0 %v830
        %v832 = vpop.xlane.xlu0 %831
        %v833 = vsel %vm695, %v820, 0.0
        %834 = vadd.xlane.f32.xlu0 %v833
        %v835 = vpop.xlane.xlu0 %834
        %v836 = vsel %vm695, %v822, 0.0
        %837 = vadd.xlane.f32.xlu0 %v836
        %v838 = vpop.xlane.xlu0 %837
        %v839 = vadd.f32 %v823, %v829
        %v840 = vadd.f32 %v824, %v832
        %v841 = vadd.f32 %v825, %v835
        %v842 = vadd.f32 %v826, %v838
        %v843 = vpack.c.bf16 %v816, %v816
        %v844 = vpack.c.bf16 %v818, %v818
        %v845 = vpack.c.bf16 %v820, %v820
        %v846 = vpack.c.bf16 %v822, %v822
        %847 = vrot.lane.b32.xlu0 %v692, 112
        %v848 = vpop.permute.xlu0 %847
        %v850 = vsel %vm695, %v843, 0
        %vm852 = vcmask 1043456
        %v854 = vsel %vm852, %v848, 0
        %856 = vmatpush.bf16.msra.mxu0 0
        %857 = vmatpush.bf16.msra.mxu0 0
        %858 = vmatpush.bf16.msra.mxu0 0
        %859 = vmatpush.bf16.msra.mxu0 0
        %860 = vmatpush.bf16.msra.mxu0 0
        %861 = vmatpush.bf16.msra.mxu0 0
        %862 = vmatpush.bf16.msra.mxu0 0
        %863 = vmatpush.bf16.msra.mxu0 %v854
        %864 = vmatmul.bf16.gmra.mxu0 %v850
        %v865 = vpop.f32.mrf.mxu0
        %v866 = vadd.f32 0.0, %v865
        %v867 = vpop.f32.mrf.mxu0
        %868 = vdwg.mxu0
        %869 = vrot.lane.b32.xlu0 %v717, 112
        %v870 = vpop.permute.xlu0 %869
        %v872 = vsel %vm695, %v844, 0
        %v875 = vsel %vm852, %v870, 0
        %877 = vmatpush.bf16.msra.mxu0 0
        %878 = vmatpush.bf16.msra.mxu0 0
        %879 = vmatpush.bf16.msra.mxu0 0
        %880 = vmatpush.bf16.msra.mxu0 0
        %881 = vmatpush.bf16.msra.mxu0 0
        %882 = vmatpush.bf16.msra.mxu0 0
        %883 = vmatpush.bf16.msra.mxu0 0
        %884 = vmatpush.bf16.msra.mxu0 %v875
        %885 = vmatmul.bf16.gmra.mxu0 %v872
        %v886 = vpop.f32.mrf.mxu0
        %v887 = vadd.f32 0.0, %v886
        %v888 = vpop.f32.mrf.mxu0
        %889 = vdwg.mxu0
        %890 = vrot.lane.b32.xlu0 %v741, 112
        %v891 = vpop.permute.xlu0 %890
        %v893 = vsel %vm695, %v845, 0
        %v896 = vsel %vm852, %v891, 0
        %898 = vmatpush.bf16.msra.mxu0 0
        %899 = vmatpush.bf16.msra.mxu0 0
        %900 = vmatpush.bf16.msra.mxu0 0
        %901 = vmatpush.bf16.msra.mxu0 0
        %902 = vmatpush.bf16.msra.mxu0 0
        %903 = vmatpush.bf16.msra.mxu0 0
        %904 = vmatpush.bf16.msra.mxu0 0
        %905 = vmatpush.bf16.msra.mxu0 %v896
        %906 = vmatmul.bf16.gmra.mxu0 %v893
        %v907 = vpop.f32.mrf.mxu0
        %v908 = vadd.f32 0.0, %v907
        %v909 = vpop.f32.mrf.mxu0
        %910 = vdwg.mxu0
        %911 = vrot.lane.b32.xlu0 %v765, 112
        %v912 = vpop.permute.xlu0 %911
        %v914 = vsel %vm695, %v846, 0
        %v917 = vsel %vm852, %v912, 0
        %919 = vmatpush.bf16.msra.mxu0 0
        %920 = vmatpush.bf16.msra.mxu0 0
        %921 = vmatpush.bf16.msra.mxu0 0
        %922 = vmatpush.bf16.msra.mxu0 0
        %923 = vmatpush.bf16.msra.mxu0 0
        %924 = vmatpush.bf16.msra.mxu0 0
        %925 = vmatpush.bf16.msra.mxu0 0
        %926 = vmatpush.bf16.msra.mxu0 %v917
        %927 = vmatmul.bf16.gmra.mxu0 %v914
        %v928 = vpop.f32.mrf.mxu0
        %v929 = vadd.f32 0.0, %v928
        %v930 = vpop.f32.mrf.mxu0
        %931 = vdwg.mxu0
        %v932 = vadd.f32 %v823, %v866
        %v933 = vadd.f32 %v824, %v887
        %v934 = vadd.f32 %v825, %v908
        %v935 = vadd.f32 %v826, %v929
        %v936 = vrcp.pop %v839
        %v937 = vmul.f32 %v839, %v936
        %v938 = vsub.f32 1.0, %v937
        %v939 = vmul.f32 %v936, %v938
        %v940 = vadd.f32 %v936, %v939
        %vm941 = vweird.f32 %v839
        %vm942 = vweird.f32 %v936
        %vm943 = vmor %vm941, %vm942
        %v944 = vsel %vm943, %v936, %v940
        %v945 = vand.u32 2147483647, %v839
        %vm946 = vcmp.eq.f32.partialorder %v945, 8.507059e+37
        %v947 = vand.u32 %v839, 2147483648
        %v948 = vor.u32 1.1754944e-38, %v947
        %v949 = vsel %vm946, %v948, %v944
        %v950 = vmul.f32 1.0, %v949
        %v951 = vrcp.pop %v840
        %v952 = vmul.f32 %v840, %v951
        %v953 = vsub.f32 1.0, %v952
        %v954 = vmul.f32 %v951, %v953
        %v955 = vadd.f32 %v951, %v954
        %vm956 = vweird.f32 %v840
        %vm957 = vweird.f32 %v951
        %vm958 = vmor %vm956, %vm957
        %v959 = vsel %vm958, %v951, %v955
        %v960 = vand.u32 2147483647, %v840
        %vm961 = vcmp.eq.f32.partialorder %v960, 8.507059e+37
        %v962 = vand.u32 %v840, 2147483648
        %v963 = vor.u32 1.1754944e-38, %v962
        %v964 = vsel %vm961, %v963, %v959
        %v965 = vmul.f32 1.0, %v964
        %v966 = vrcp.pop %v841
        %v967 = vmul.f32 %v841, %v966
        %v968 = vsub.f32 1.0, %v967
        %v969 = vmul.f32 %v966, %v968
        %v970 = vadd.f32 %v966, %v969
        %vm971 = vweird.f32 %v841
        %vm972 = vweird.f32 %v966
        %vm973 = vmor %vm971, %vm972
        %v974 = vsel %vm973, %v966, %v970
        %v975 = vand.u32 2147483647, %v841
        %vm976 = vcmp.eq.f32.partialorder %v975, 8.507059e+37
        %v977 = vand.u32 %v841, 2147483648
        %v978 = vor.u32 1.1754944e-38, %v977
        %v979 = vsel %vm976, %v978, %v974
        %v980 = vmul.f32 1.0, %v979
        %v981 = vrcp.pop %v842
        %v982 = vmul.f32 %v842, %v981
        %v983 = vsub.f32 1.0, %v982
        %v984 = vmul.f32 %v981, %v983
        %v985 = vadd.f32 %v981, %v984
        %vm986 = vweird.f32 %v842
        %vm987 = vweird.f32 %v981
        %vm988 = vmor %vm986, %vm987
        %v989 = vsel %vm988, %v981, %v985
        %v990 = vand.u32 2147483647, %v842
        %vm991 = vcmp.eq.f32.partialorder %v990, 8.507059e+37
        %v992 = vand.u32 %v842, 2147483648
        %v993 = vor.u32 1.1754944e-38, %v992
        %v994 = vsel %vm991, %v993, %v989
        %v995 = vmul.f32 1.0, %v994
        %v996 = vmul.f32 %v932, %v950
        %v997 = vmul.f32 %v933, %v965
        %v998 = vmul.f32 %v934, %v980
        %v999 = vmul.f32 %v935, %v995
        %1001 = vrot.lane.b32.xlu0 %v997, 8
        %v1002 = vpop.permute.xlu0 %1001
        %1005 = vrot.lane.b32.xlu0 %v998, 16
        %v1006 = vpop.permute.xlu0 %1005
        %1009 = vrot.lane.b32.xlu0 %v999, 24
        %v1010 = vpop.permute.xlu0 %1009
        %v1012 = vsel %vm695, %v996, %v1002
        %vm1013 = vcmask 130048
        %v1014 = vsel %vm1013, %v1012, %v1006
        %vm1015 = vcmask 195584
        %v1016 = vsel %vm1015, %v1014, %v1010
        %v1017 = vpack.c.bf16 %v1016, %v1016
        %v1018 = vld [vmem:[%s562] sm:$0xf]
        %v1019 = vld [vmem:[%s562 + $0x4] sm:$0xf]
        %v1020 = vld [vmem:[%s562 + $0x8] sm:$0xf]
        %v1021 = vld [vmem:[%s562 + $0xc] sm:$0xf]
        %v1026 = vunpack.c.l.b16 %v1018
        %v1027 = vunpack.c.l.b16 %v1019
        %v1028 = vunpack.c.l.b16 %v1020
        %v1029 = vunpack.c.l.b16 %v1021
        %v1030 = vpack.c.b16 %v1027, %v1026
        %v1031 = vpack.c.b16 %v1029, %v1028
        %v1035 = vsel %vm596, %v1017, 0
        %1037 = vmatpush.bf16.msra.mxu0 0
        %1038 = vmatpush.bf16.msra.mxu0 0
        %1039 = vmatpush.bf16.msra.mxu0 0
        %1040 = vmatpush.bf16.msra.mxu0 0
        %1041 = vmatpush.bf16.msra.mxu0 0
        %1042 = vmatpush.bf16.msra.mxu0 0
        %1043 = vmatpush.bf16.msra.mxu0 %v1031
        %1044 = vmatpush.bf16.msra.mxu0 %v1030
        %1045 = vmatmul.bf16.gmra.mxu0 %v1035
        %v1046 = vpop.f32.mrf.mxu0
        %v1047 = vadd.f32 %v593, %v1046
        %v1048 = vpop.f32.mrf.mxu0
        %1049 = vdwg.mxu0
        %v1050 = vld [vmem:[%s565] sm:$0x1]
        %v1051 = vld [vmem:[%s568] sm:$0x1]
        %v1052 = vsel %vm596, %v1047, 0.0
        %1053 = vadd.xlane.f32.xlu0 %v1052
        %v1054 = vpop.xlane.xlu0 %1053
        %v1055 = vmul.f32 %v1054, %v606
        %v1056 = vsub.f32 %v1047, %v1055
        %v1057 = vmul.f32 %v1056, %v1056
        %v1058 = vsel %vm596, %v1057, 0.0
        %1059 = vadd.xlane.f32.xlu0 %v1058
        %v1060 = vpop.xlane.xlu0 %1059
        %v1061 = vmul.f32 %v1060, %v606
        %v1062 = vadd.f32 %v1061, 1e-05
        %v1063 = vrsqrt.pop %v1062
        %v1064 = vmul.f32 %v1063, %v1062
        %v1065 = vmul.f32 %v1064, %v1063
        %v1066 = vmul.f32 0.5, %v1065
        %v1067 = vsub.f32 1.5, %v1066
        %v1068 = vmul.f32 %v1063, %v1067
        %vm1069 = vweird.f32 %v1062
        %vm1070 = vweird.f32 %v1063
        %vm1071 = vmor %vm1069, %vm1070
        %v1072 = vsel %vm1071, %v1063, %v1068
        %v1073 = vmul.f32 %v1056, %v1072
        %v1075 = vperm.slane %v1050, 0
        %v1077 = vmul.f32 %v1073, %v1075
        %v1079 = vperm.slane %v1051, 0
        %v1081 = vadd.f32 %v1077, %v1079
        %v1082 = vpack.c.bf16 %v1081, %v1081
        %v1083 = vld [vmem:[%s573] sm:$0xf]
        %v1084 = vld [vmem:[%s573 + $0x4] sm:$0xf]
        %v1085 = vld [vmem:[%s573 + $0x8] sm:$0xf]
        %v1086 = vld [vmem:[%s573 + $0xc] sm:$0xf]
        %v1087 = vld [vmem:[%s576] sm:$0x1]
        %v1089 = vperm.slane %v1087, 0
        %v1095 = vunpack.c.l.b16 %v1083
        %v1096 = vunpack.c.l.b16 %v1084
        %v1097 = vunpack.c.l.b16 %v1085
        %v1098 = vunpack.c.l.b16 %v1086
        %v1099 = vpack.c.b16 %v1096, %v1095
        %v1100 = vpack.c.b16 %v1098, %v1097
        %v1104 = vsel %vm596, %v1082, 0
        %1106 = vmatpush.bf16.msra.mxu0 0
        %1107 = vmatpush.bf16.msra.mxu0 0
        %1108 = vmatpush.bf16.msra.mxu0 0
        %1109 = vmatpush.bf16.msra.mxu0 0
        %1110 = vmatpush.bf16.msra.mxu0 0
        %1111 = vmatpush.bf16.msra.mxu0 0
        %1112 = vmatpush.bf16.msra.mxu0 %v1100
        %1113 = vmatpush.bf16.msra.mxu0 %v1099
        %1114 = vmatmul.bf16.gmra.mxu0 %v1104
        %v1115 = vpop.f32.mrf.mxu0
        %v1116 = vadd.f32 %v1089, %v1115
        %v1117 = vpop.f32.mrf.mxu0
        %1118 = vdwg.mxu0
        %v1119 = vmax.f32 %v1116, 0.0
        %v1120 = vpack.c.bf16 %v1119, %v1119
        %v1121 = vld [vmem:[%s581] sm:$0xf]
        %v1122 = vld [vmem:[%s581 + $0x4] sm:$0xf]
        %v1123 = vld [vmem:[%s581 + $0x8] sm:$0xf]
        %v1124 = vld [vmem:[%s581 + $0xc] sm:$0xf]
        %v1125 = vld [vmem:[%s581 + $0x10] sm:$0xf]
        %v1126 = vld [vmem:[%s581 + $0x14] sm:$0xf]
        %v1127 = vld [vmem:[%s581 + $0x18] sm:$0xf]
        %v1128 = vld [vmem:[%s581 + $0x1c] sm:$0xf]
        %v1129 = vld [vmem:[%s581 + $0x20] sm:$0xf]
        %v1130 = vld [vmem:[%s581 + $0x24] sm:$0xf]
        %v1131 = vld [vmem:[%s581 + $0x28] sm:$0xf]
        %v1132 = vld [vmem:[%s581 + $0x2c] sm:$0xf]
        %v1133 = vld [vmem:[%s581 + $0x30] sm:$0xf]
        %v1134 = vld [vmem:[%s581 + $0x34] sm:$0xf]
        %v1135 = vld [vmem:[%s581 + $0x38] sm:$0xf]
        %v1136 = vld [vmem:[%s581 + $0x3c] sm:$0xf]
        %v1137 = vld [vmem:[%s584] sm:$0x1]
        %v1139 = vperm.slane %v1137, 0
        %v1157 = vunpack.c.l.b16 %v1121
        %v1158 = vunpack.c.l.b16 %v1122
        %v1159 = vunpack.c.l.b16 %v1123
        %v1160 = vunpack.c.l.b16 %v1124
        %v1161 = vunpack.c.l.b16 %v1125
        %v1162 = vunpack.c.l.b16 %v1126
        %v1163 = vunpack.c.l.b16 %v1127
        %v1164 = vunpack.c.l.b16 %v1128
        %v1165 = vunpack.c.l.b16 %v1129
        %v1166 = vunpack.c.l.b16 %v1130
        %v1167 = vunpack.c.l.b16 %v1131
        %v1168 = vunpack.c.l.b16 %v1132
        %v1169 = vunpack.c.l.b16 %v1133
        %v1170 = vunpack.c.l.b16 %v1134
        %v1171 = vunpack.c.l.b16 %v1135
        %v1172 = vunpack.c.l.b16 %v1136
        %v1173 = vpack.c.b16 %v1158, %v1157
        %v1174 = vpack.c.b16 %v1160, %v1159
        %v1175 = vpack.c.b16 %v1162, %v1161
        %v1176 = vpack.c.b16 %v1164, %v1163
        %v1177 = vpack.c.b16 %v1166, %v1165
        %v1178 = vpack.c.b16 %v1168, %v1167
        %v1179 = vpack.c.b16 %v1170, %v1169
        %v1180 = vpack.c.b16 %v1172, %v1171
        %1189 = vmatpush.bf16.msra.mxu0 %v1180
        %1190 = vmatpush.bf16.msra.mxu0 %v1179
        %1191 = vmatpush.bf16.msra.mxu0 %v1178
        %1192 = vmatpush.bf16.msra.mxu0 %v1177
        %1193 = vmatpush.bf16.msra.mxu0 %v1176
        %1194 = vmatpush.bf16.msra.mxu0 %v1175
        %1195 = vmatpush.bf16.msra.mxu0 %v1174
        %1196 = vmatpush.bf16.msra.mxu0 %v1173
        %1197 = vmatmul.bf16.gmra.mxu0 %v1120
        %v1198 = vpop.f32.mrf.mxu0
        %v1199 = vadd.f32 %v1139, %v1198
        %v1200 = vpop.f32.mrf.mxu0
        %1201 = vdwg.mxu0
        %v1202 = vadd.f32 %v1199, %v1047
        %p1203 = scmp.lt.s32.totalorder %s31, 1
        // Predicated region
        $region73: #{tpu_custom_call.1} parent=67 // pred_check
          %p1204 = pneg %p1203
        $region74: #{tpu_custom_call.1} parent=67 // pred_check_branch
          %1206 = sbr.rel (%p1204) target = $region76
        $region75: #{tpu_custom_call.1} parent=67 // pred_region
          %1207 = vst.msk [vmem:[#allocation2] sm:$0xff] %vm596, %v1202
        $region76: #{tpu_custom_call.1} parent=67 // pred_fallthru
          _
        %p1208 = scmp.eq.s32.totalorder %s31, 1
        // Predicated region
        $region77: #{tpu_custom_call.1} parent=67 // pred_check
          %p1209 = pneg %p1208
        $region78: #{tpu_custom_call.1} parent=67 // pred_check_branch
          %1211 = sbr.rel (%p1209) target = $region80
        $region79: #{tpu_custom_call.1} parent=67 // pred_region
          %v1212 = vpack.c.bf16 %v1202, %v1202
          %vm1213 = vcmask 257024
          %1214 = vst.msk [vmem:[%s542] sm:$0xf] %vm1213, %v1212
        $region80: #{tpu_custom_call.1} parent=67 // pred_fallthru
          _
        %s1215 = sand.u32 %s353, 1
        %s1216 = scalar_lea.sflag [#allocation4], %s1215
        %s1217 = sand.u32 %s353, 1
        %s1218 = smul.addr %s1217, 4
        %s1219 = scalar_lea.vmem [#allocation3], %s1218
        // Predicated region
        $region81: #{tpu_custom_call.1} parent=67 // pred_check
          %p1220 = pneg %p363
        $region82: #{tpu_custom_call.1} parent=67 // pred_check_branch
          %1222 = sbr.rel (%p1220) target = $region84
        $region83: #{tpu_custom_call.1} parent=67 // pred_region
          %1224 = vsyncadd %s1216, 0
          %s1225 = smul.addr %s30, 4
          %s1226 = scalar_lea.hbm %s12, %s1225
          %s1228 = sshll.u32 %s1219, 4
          %s1229 = int_to_ptr.vmem [resolvable:$true] %s1228
          %s1230 = sshll.u32 %s1226, 4
          %s1231 = int_to_ptr.hbm [resolvable:$true] %s1230
          %1233 = dma.vmem_to_hbm [thread:$0]  %s1229, 64, %s1231, %s1216
        $region84: #{tpu_custom_call.1} parent=67 // pred_fallthru
          _
      $region68: #{tpu_custom_call.1} parent=5 // pred_fallthru
        _
      %p1234 = scmp.le.s32.totalorder 2, %s21
      // Predicated region
      $region85: #{tpu_custom_call.1} parent=5 // pred_check
        %p1235 = pneg %p1234
      $region86: #{tpu_custom_call.1} parent=5 // pred_check_branch
        %1237 = sbr.rel (%p1235) target = $region88
      $region87: #{tpu_custom_call.1} parent=5 // pred_region
        %s1238 = ssub.s32 %s21, 2
        // Predicated region
        $region89: #{tpu_custom_call.1} parent=87 // pred_check
          %p1239 = pneg %p369
        $region90: #{tpu_custom_call.1} parent=87 // pred_check_branch
          %1241 = sbr.rel (%p1239) target = $region92
        $region91: #{tpu_custom_call.1} parent=87 // pred_region
          %s1242 = sand.u32 %s354, 1
          %s1243 = scalar_lea.sflag [#allocation4], %s1242
          %s1244 = sand.u32 %s354, 1
          %s1245 = smul.addr %s1244, 4
          %s1246 = scalar_lea.vmem [#allocation3], %s1245
          %1248 = dma.done %s1243, 64
        $region92: #{tpu_custom_call.1} parent=87 // pred_fallthru
          _
      $region88: #{tpu_custom_call.1} parent=5 // pred_fallthru
        _
    $region6: #{tpu_custom_call.1} parent=1 // loop_footer
      %s25 = sadd.s32 1, %s21
    $region7: #{tpu_custom_call.1} parent=1 // loop_footer_branch
      %20 = sbr.rel target = $region3
    $region8: #{tpu_custom_call.1} parent=1 // loop_exit
      _
    %1249 = vsyncpa [#allocation4], 1
    %s1250 = scalar_lea.sflag [#allocation4], 1
    %1251 = vsyncpa %s1250, 1

</llo_original>
